<compile_context>
chip_gen: v7x
topology: tpu7x:2x2x1
jax: 0.10.0
libtpu: 0.0.40
codegen_flags: <defaults>
</compile_context>

<pallas_src>
import math

import jax
import jax.numpy as jnp
from jax import lax
from jax.experimental import pallas as pl
from jax.experimental.pallas import tpu as pltpu

_MXU = jnp.bfloat16                       # matmul operand dtype (f32 accumulation)


def _vmem_limit_bytes():
    # Generation-aware scoped-VMEM limit (v7x has 64 MiB/TC, v5e/v6e 128 MiB).
    try:
        cap = pltpu.get_tpu_info().vmem_capacity_bytes
    except Exception:
        cap = 64 * 1024 * 1024
    return max(32 * 1024 * 1024, min(int(cap * 0.7), 100 * 1024 * 1024))


_VMEM_LIMIT = _vmem_limit_bytes()


# ----------------------------------------------------------------------------
# Kernel A: NFs (bf16) + CSA maps for fore AND back SISM in one call.
# ----------------------------------------------------------------------------
def _nfs_csa_kernel(feats_ref, sism_ref, nfs_ref, csa_ref):
    N, C, HW = feats_ref.shape
    feats = feats_ref[...]                                   # (N, C, HW) f32

    # NFs = F.normalize(feats, dim=1):  x / max(||x||, 1e-12)
    ss = jnp.sum(feats * feats, axis=1, keepdims=True)
    nfs = feats * lax.rsqrt(jnp.maximum(ss, 1e-24))
    nfs_bf = nfs.astype(_MXU)
    nfs_ref[...] = nfs_bf                                    # bf16 HBM intermediate

    for b in range(2):                                       # fore / back (static unroll)
        sb = sism_ref[b]                                     # (N, HW) f32

        # SIVs = normalize(mean_hw(NFs * SISM), dim=1).  Kept as a VPU multiply +
        # lane reduce: it is tiny next to the MXU contractions below and lowers
        # unconditionally.
        siv = jnp.sum(nfs * sb[:, None, :], axis=2) * (1.0 / HW)        # (N, C)
        siv = siv * lax.rsqrt(
            jnp.maximum(jnp.sum(siv * siv, axis=1, keepdims=True), 1e-24))

        # correlation_maps[n, m, hw] = sum_c SIV[m, c] * NFs[n, c, hw]
        # (== F.conv2d(NFs, weight=SIVs))   MXU, bf16 operands, f32 accumulation.
        sivb = jnp.broadcast_to(siv.astype(_MXU)[None], (N, N, C))
        corr = lax.dot_general(sivb, nfs_bf, (((2,), (1,)), ((0,), (0,))),
                               preferred_element_type=jnp.float32)      # (N, N, HW)
        corr = corr * lax.rsqrt(
            jnp.maximum(jnp.sum(corr * corr, axis=2, keepdims=True), 1e-24))

        # correlation_matrix[n] = corr[n] @ corr[n]^T  (contract HW on the MXU)
        corr_bf = corr.astype(_MXU)
        cmat = lax.dot_general(corr_bf, corr_bf, (((2,), (2,)), ((0,), (0,))),
                               preferred_element_type=jnp.float32)      # (N, N, N)

        # weight_vectors = softmax(sum_k cmat, dim=1)
        s = jnp.sum(cmat, axis=2)
        s = s - jnp.max(s, axis=1, keepdims=True)
        e = jnp.exp(s)
        wv = e / jnp.sum(e, axis=1, keepdims=True)                       # (N, N)

        # CSA[n, hw] = sum_m wv[n, m] * corr[n, m, hw]  (batched 1xN @ NxHW)
        csa = lax.dot_general(wv[:, None, :], corr, (((2,), (1,)), ((0,), (0,))),
                              preferred_element_type=jnp.float32)[:, 0, :]
        mn = jnp.min(csa, axis=1, keepdims=True)
        mx = jnp.max(csa, axis=1, keepdims=True)
        csa_ref[b] = (csa - mn) / (mx - mn + 1e-12)


def nfs_csa_pallas(feats_flat, sism_both):
    # Whole-batch, VMEM-resident (the correlation math needs all images at once).
    # At very large N*C*HW this kernel would need an HW-tiled grid.
    N, C, HW = feats_flat.shape
    return pl.pallas_call(
        _nfs_csa_kernel,
        out_shape=(jax.ShapeDtypeStruct((N, C, HW), _MXU),
                   jax.ShapeDtypeStruct((2, N, HW), jnp.float32)),
        in_specs=[pl.BlockSpec(memory_space=pltpu.MemorySpace.VMEM),
                  pl.BlockSpec(memory_space=pltpu.MemorySpace.VMEM)],
        out_specs=(pl.BlockSpec(memory_space=pltpu.MemorySpace.VMEM),
                   pl.BlockSpec(memory_space=pltpu.MemorySpace.VMEM)),
        compiler_params=pltpu.CompilerParams(vmem_limit_bytes=_VMEM_LIMIT),
    )(feats_flat, sism_both)


# ----------------------------------------------------------------------------
# Fused ResNet block body, shared by the cosal block and the fuse block.
# The zero-padded image lives as a flat ((H+2)*(W+2)+2, C) bf16 VMEM scratch,
# so every 3x3 tap is a contiguous 2D slice at a static offset.
# ----------------------------------------------------------------------------
def _scatter_into_padded(pad_ref, src, H, W, src_stride):
    """Write the HxW interior of `src` into the flat padded buffer and (re)zero
    the pad/gap rows.  src rows for image row h start at h*src_stride."""
    W2 = W + 2
    Cc = src.shape[-1]
    dt = pad_ref.dtype
    pad_ref[pl.ds(0, W2 + 1), :] = jnp.zeros((W2 + 1, Cc), dt)          # top + left pad
    gap = jnp.zeros((2, Cc), dt)
    for h in range(H):
        pad_ref[pl.ds((h + 1) * W2 + 1, W), :] = (
            src[h * src_stride:h * src_stride + W, :].astype(dt))
        if h + 1 < H:
            pad_ref[pl.ds((h + 1) * W2 + 1 + W, 2), :] = gap            # row gap
    pad_ref[pl.ds(H * W2 + W + 1, W + 5), :] = jnp.zeros((W + 5, Cc), dt)  # tail


def _conv3x3_padded(pad_ref, w_ref, H, W):
    """3x3 conv over the padded flat buffer; returns the extended (H*(W+2), Cout)
    accumulator (the two junk columns per row are discarded by the caller)."""
    W2 = W + 2
    R = H * W2
    cout = w_ref.shape[-1]
    acc = jnp.zeros((R, cout), jnp.float32)
    for dh in range(3):
        for dw in range(3):
            tap = pad_ref[pl.ds(dh * W2 + dw, R), :]                    # contiguous slice
            acc = acc + jnp.dot(tap, w_ref[dh, dw],
                                preferred_element_type=jnp.float32)
    return acc


def _resblock_body(x, w1_ref, b1_ref, w2_ref, b2_ref, ws_ref, bs_ref,
                   o_view, xpad, hpad, H, W, out_dtype):
    """relu(conv3x3(relu(conv3x3(x))) + conv1x1(x)); x is an (H*W, Cin) bf16 value."""
    W2 = W + 2

    # 1x1 shortcut projection.
    sc = jnp.dot(x, ws_ref[...], preferred_element_type=jnp.float32) + bs_ref[...]

    # conv1 + relu.
    _scatter_into_padded(xpad, x, H, W, src_stride=W)
    acc1 = _conv3x3_padded(xpad, w1_ref, H, W)
    h1 = jnp.maximum(acc1 + b1_ref[...], 0.0).astype(hpad.dtype)        # extended grid

    # conv2 (intermediate activation never leaves VMEM).
    _scatter_into_padded(hpad, h1, H, W, src_stride=W2)
    acc2 = _conv3x3_padded(hpad, w2_ref, H, W)
    y = acc2 + b2_ref[...]

    # add shortcut + relu; extract the valid (H, W) rows of the extended grid.
    for h in range(H):
        band = y[h * W2:h * W2 + W, :] + sc[h * W:(h + 1) * W, :]
        o_view[pl.ds(h * W, W), :] = jnp.maximum(band, 0.0).astype(out_dtype)


# ----------------------------------------------------------------------------
# Kernel C: cosal block.  Gathered + CSA-scaled SCF block computed in-kernel
# (one MXU matmul) and fed straight to the ResNet block -> the (N,HW,HW) SCFs
# and the (2N,H,W,HW) conv input never touch HBM.
# ----------------------------------------------------------------------------
def _make_cosal_kernel(H, W):
    def kernel(nfs_ref, nfsg_ref, csa_ref, w1_ref, b1_ref, w2_ref, b2_ref,
               ws_ref, bs_ref, o_ref, xpad, hpad):
        a = nfs_ref[0]                       # (C, HW) bf16
        g = nfsg_ref[0, 0]                   # (C, HW) bf16, columns pre-gathered by idx
        c = csa_ref[0, 0]                    # (1, HW) f32

        # x[q, k] = CSA[q] * <NFs[:, q], NFs[:, idx[k]]>  (== RSCFs * CSA, NHWC).
        a_s = (a.astype(jnp.float32) * c).astype(_MXU)      # fold CSA into the LHS
        x = lax.dot_general(a_s, g, (((0,), (0,)), ((), ())),
                            preferred_element_type=jnp.float32).astype(_MXU)
        _resblock_body(x, w1_ref, b1_ref, w2_ref, b2_ref, ws_ref, bs_ref,
                       o_ref.at[0, 0], xpad, hpad, H, W, o_ref.dtype)
    return kernel


def cosal_block_pallas(nfs, nfs_g, csa_r, p, H, W):
    N, C, HW = nfs.shape
    cout = p["b1"].shape[0]
    PAD = (H + 2) * (W + 2) + 2
    w1 = p["w1"].astype(_MXU)
    w2 = p["w2"].astype(_MXU)
    ws = p["ws"].astype(_MXU)
    b1 = p["b1"].reshape(1, cout)
    b2 = p["b2"].reshape(1, cout)
    bs = p["bs"].reshape(1, cout)
    return pl.pallas_call(
        _make_cosal_kernel(H, W),
        out_shape=jax.ShapeDtypeStruct((2, N, HW, cout), _MXU),
        grid=(2, N),
        in_specs=[
            pl.BlockSpec((1, C, HW), lambda b, n: (n, 0, 0)),
            pl.BlockSpec((1, 1, C, HW), lambda b, n: (b, n, 0, 0)),
            pl.BlockSpec((1, 1, 1, HW), lambda b, n: (b, n, 0, 0)),
            pl.BlockSpec((3, 3, HW, cout), lambda b, n: (0, 0, 0, 0)),
            pl.BlockSpec((1, cout), lambda b, n: (0, 0)),
            pl.BlockSpec((3, 3, cout, cout), lambda b, n: (0, 0, 0, 0)),
            pl.BlockSpec((1, cout), lambda b, n: (0, 0)),
            pl.BlockSpec((HW, cout), lambda b, n: (0, 0)),
            pl.BlockSpec((1, cout), lambda b, n: (0, 0)),
        ],
        out_specs=pl.BlockSpec((1, 1, HW, cout), lambda b, n: (b, n, 0, 0)),
        scratch_shapes=[pltpu.VMEM((PAD, HW), _MXU),
                        pltpu.VMEM((PAD, cout), _MXU)],
        compiler_params=pltpu.CompilerParams(
            dimension_semantics=("parallel", "parallel"),
            vmem_limit_bytes=_VMEM_LIMIT),
    )(nfs, nfs_g, csa_r, w1, b1, w2, b2, ws, bs)


# ----------------------------------------------------------------------------
# Kernel D: fuse block.  Reads fore/back cosal features with two BlockSpecs and
# concatenates them in VMEM (no XLA concat round trip).
# ----------------------------------------------------------------------------
def _make_fuse_kernel(H, W):
    def kernel(fa_ref, fb_ref, w1_ref, b1_ref, w2_ref, b2_ref,
               ws_ref, bs_ref, o_ref, xpad, hpad):
        xa = fa_ref[0, 0]                    # (HW, 128) bf16 (fore)
        xb = fb_ref[0, 0]                    # (HW, 128) bf16 (back)
        x = jnp.concatenate([xa, xb], axis=-1)                 # (HW, 256) in VMEM
        _resblock_body(x, w1_ref, b1_ref, w2_ref, b2_ref, ws_ref, bs_ref,
                       o_ref.at[0], xpad, hpad, H, W, o_ref.dtype)
    return kernel


def fuse_block_pallas(cosal, p, H, W):
    _, N, HW, ch = cosal.shape
    cin = 2 * ch
    cout = p["b1"].shape[0]
    PAD = (H + 2) * (W + 2) + 2
    w1 = p["w1"].astype(_MXU)
    w2 = p["w2"].astype(_MXU)
    ws = p["ws"].astype(_MXU)
    b1 = p["b1"].reshape(1, cout)
    b2 = p["b2"].reshape(1, cout)
    bs = p["bs"].reshape(1, cout)
    return pl.pallas_call(
        _make_fuse_kernel(H, W),
        out_shape=jax.ShapeDtypeStruct((N, HW, cout), jnp.float32),
        grid=(N,),
        in_specs=[
            pl.BlockSpec((1, 1, HW, ch), lambda n: (0, n, 0, 0)),
            pl.BlockSpec((1, 1, HW, ch), lambda n: (1, n, 0, 0)),
            pl.BlockSpec((3, 3, cin, cout), lambda n: (0, 0, 0, 0)),
            pl.BlockSpec((1, cout), lambda n: (0, 0)),
            pl.BlockSpec((3, 3, cout, cout), lambda n: (0, 0, 0, 0)),
            pl.BlockSpec((1, cout), lambda n: (0, 0)),
            pl.BlockSpec((cin, cout), lambda n: (0, 0)),
            pl.BlockSpec((1, cout), lambda n: (0, 0)),
        ],
        out_specs=pl.BlockSpec((1, HW, cout), lambda n: (n, 0, 0)),
        scratch_shapes=[pltpu.VMEM((PAD, cin), _MXU),
                        pltpu.VMEM((PAD, cout), _MXU)],
        compiler_params=pltpu.CompilerParams(
            dimension_semantics=("parallel",),
            vmem_limit_bytes=_VMEM_LIMIT),
    )(cosal, cosal, w1, b1, w2, b2, ws, bs)


# ----------------------------------------------------------------------------
# Glue (plain JAX): bilinear resize, argsort/small-gather, forward orchestration.
# ----------------------------------------------------------------------------
def bilinear_align_corners(x, out_h, out_w):
    """F.interpolate(..., mode='bilinear', align_corners=True) on NCHW."""
    N, C, Hs, Ws = x.shape
    if (Hs, Ws) == (out_h, out_w):
        return x
    ys = (jnp.arange(out_h, dtype=jnp.float32) * (Hs - 1) / (out_h - 1)
          if out_h > 1 else jnp.zeros((out_h,), jnp.float32))
    xs = (jnp.arange(out_w, dtype=jnp.float32) * (Ws - 1) / (out_w - 1)
          if out_w > 1 else jnp.zeros((out_w,), jnp.float32))
    y0 = jnp.clip(jnp.floor(ys).astype(jnp.int32), 0, Hs - 1)
    y1 = jnp.clip(y0 + 1, 0, Hs - 1)
    x0 = jnp.clip(jnp.floor(xs).astype(jnp.int32), 0, Ws - 1)
    x1 = jnp.clip(x0 + 1, 0, Ws - 1)
    wy = (ys - y0.astype(jnp.float32))[None, None, :, None]
    wx = (xs - x0.astype(jnp.float32))[None, None, None, :]

    def g(yi, xi):
        return x[:, :, yi, :][:, :, :, xi]

    top = g(y0, x0) * (1.0 - wx) + g(y0, x1) * wx
    bot = g(y1, x0) * (1.0 - wx) + g(y1, x1) * wx
    return top * (1.0 - wy) + bot * wy


def fore_back_fusion_forward(feats, sisms, params):
    """ForeBackFusionModule.forward.  feats: (N,C,H,W); sisms: (N,1,Hs,Ws)."""
    N, C, H, W = feats.shape
    HW = H * W

    # interp(1 - S) == 1 - interp(S), so one resize serves both branches.
    sism = bilinear_align_corners(sisms, H, W).reshape(N, HW)
    sism_both = jnp.stack([sism, 1.0 - sism], axis=0)            # fore, back

    nfs, csa = nfs_csa_pallas(feats.reshape(N, C, HW), sism_both)

    # TODO(synk): argsort (and the small NFs column gather feeding kernel C) stay in
    # plain JAX; they only touch (2,N,HW) / (N,C,HW)-sized tensors.
    idx = jnp.argsort(-csa, axis=-1)                             # descending, (2,N,HW)
    nfs_g = jnp.take_along_axis(jnp.broadcast_to(nfs[None], (2, N, C, HW)),
                                idx[:, :, None, :], axis=3)      # (2,N,C,HW) bf16
    csa_r = csa[:, :, None, :]                                   # (2,N,1,HW)

    # Fore + back share the cosal ResNet block weights -> one (2,N) grid.
    cosal = cosal_block_pallas(nfs, nfs_g, csa_r, params["cosal_block"], H, W)
    out = fuse_block_pallas(cosal, params["fuse_block"], H, W)   # (N, HW, 128) f32
    return out.reshape(N, H, W, -1).transpose(0, 3, 1, 2)        # back to NCHW


def init_resnet_block(key, cin, cout):
    k1, k2, k3 = jax.random.split(key, 3)
    return {
        "w1": jax.random.normal(k1, (3, 3, cin, cout), jnp.float32) / math.sqrt(9 * cin),
        "b1": jnp.zeros((cout,), jnp.float32),
        "w2": jax.random.normal(k2, (3, 3, cout, cout), jnp.float32) / math.sqrt(9 * cout),
        "b2": jnp.zeros((cout,), jnp.float32),
        "ws": jax.random.normal(k3, (cin, cout), jnp.float32) / math.sqrt(cin),
        "bs": jnp.zeros((cout,), jnp.float32),
    }


if __name__ == "__main__":
    # Small shapes consistent with the module: ForeBackFusionModule(H=8, W=8)
    N, C, H, W = 2, 4, 8, 8
    HW = H * W

    root = jax.random.PRNGKey(0)
    kp1, kp2, kf, ks = jax.random.split(root, 4)
    params = {
        "cosal_block": init_resnet_block(kp1, HW, 128),   # ResNetBlock(H*W, 128)
        "fuse_block": init_resnet_block(kp2, 256, 128),   # ResNetBlock(256, 128)
    }

    feats = jax.random.normal(kf, (N, C, H, W), jnp.float32)
    sisms = jax.random.uniform(ks, (N, 1, 16, 16), jnp.float32)   # resized to (H, W) inside

    fwd = jax.jit(fore_back_fusion_forward)
    out = fwd(feats, sisms, params)
    jax.block_until_ready(out)

    assert out.shape == (N, 128, H, W), out.shape
    assert bool(jnp.all(jnp.isfinite(out)))
    print("KERNEL_OK")
</pallas_src>

<mosaic_0001>
module attributes {stable_mosaic.version = 11 : i64} {
  func.func @_nfs_csa_kernel(%arg0: memref<2x4x64xf32, #tpu.memory_space<vmem>>, %arg1: memref<2x2x64xf32, #tpu.memory_space<vmem>>, %arg2: memref<2x4x64xbf16, #tpu.memory_space<vmem>>, %arg3: memref<2x2x64xf32, #tpu.memory_space<vmem>>) attributes {dimension_semantics = [], scalar_prefetch = 0 : i64, scratch_operands = 0 : i64, tpu.core_type = #tpu.core_type<tc>} {
    %c0 = arith.constant 0 : index
    %c0_0 = arith.constant 0 : index
    %c0_1 = arith.constant 0 : index
    %0 = vector.load %arg0[%c0, %c0_0, %c0_1] : memref<2x4x64xf32, #tpu.memory_space<vmem>>, vector<2x4x64xf32>
    %1 = arith.mulf %0, %0 : vector<2x4x64xf32>
    %cst = arith.constant dense<0.000000e+00> : vector<2x64xf32>
    %2 = vector.multi_reduction <add>, %1, %cst [1] : vector<2x4x64xf32> to vector<2x64xf32>
    %3 = vector.shape_cast %2 : vector<2x64xf32> to vector<2x1x64xf32>
    %cst_2 = arith.constant 1.000000e-24 : f32
    %4 = vector.broadcast %cst_2 : f32 to vector<2x1x64xf32>
    %5 = arith.maximumf %3, %4 : vector<2x1x64xf32>
    %6 = math.rsqrt %5 : vector<2x1x64xf32>
    %7 = vector.broadcast %6 : vector<2x1x64xf32> to vector<2x4x64xf32>
    %8 = arith.mulf %0, %7 : vector<2x4x64xf32>
    %9 = arith.truncf %8 : vector<2x4x64xf32> to vector<2x4x64xbf16>
    %c0_3 = arith.constant 0 : index
    %c0_4 = arith.constant 0 : index
    %c0_5 = arith.constant 0 : index
    %10 = vector.load %arg2[%c0_3, %c0_4, %c0_5] : memref<2x4x64xbf16, #tpu.memory_space<vmem>>, vector<2x4x64xbf16>
    tpu.vector_store %arg2[%c0_3, %c0_4, %c0_5], %9 {strides = array<i32>} : memref<2x4x64xbf16, #tpu.memory_space<vmem>>, vector<2x4x64xbf16>,
    %c0_6 = arith.constant 0 : index
    %c0_7 = arith.constant 0 : index
    %c0_8 = arith.constant 0 : index
    %11 = vector.load %arg1[%c0_6, %c0_7, %c0_8] : memref<2x2x64xf32, #tpu.memory_space<vmem>>, vector<1x2x64xf32>
    %12 = vector.shape_cast %11 : vector<1x2x64xf32> to vector<2x64xf32>
    %13 = vector.shape_cast %12 : vector<2x64xf32> to vector<2x1x64xf32>
    %14 = vector.broadcast %13 : vector<2x1x64xf32> to vector<2x4x64xf32>
    %15 = arith.mulf %8, %14 : vector<2x4x64xf32>
    %cst_9 = arith.constant dense<0.000000e+00> : vector<2x4xf32>
    %16 = vector.multi_reduction <add>, %15, %cst_9 [2] : vector<2x4x64xf32> to vector<2x4xf32>
    %cst_10 = arith.constant 1.562500e-02 : f32
    %17 = vector.broadcast %cst_10 : f32 to vector<2x4xf32>
    %18 = arith.mulf %16, %17 : vector<2x4xf32>
    %19 = arith.mulf %18, %18 : vector<2x4xf32>
    %cst_11 = arith.constant dense<0.000000e+00> : vector<2xf32>
    %20 = vector.multi_reduction <add>, %19, %cst_11 [1] : vector<2x4xf32> to vector<2xf32>
    %21 = vector.shape_cast %20 : vector<2xf32> to vector<2x1xf32>
    %cst_12 = arith.constant 1.000000e-24 : f32
    %22 = vector.broadcast %cst_12 : f32 to vector<2x1xf32>
    %23 = arith.maximumf %21, %22 : vector<2x1xf32>
    %24 = math.rsqrt %23 : vector<2x1xf32>
    %25 = vector.broadcast %24 : vector<2x1xf32> to vector<2x4xf32>
    %26 = arith.mulf %18, %25 : vector<2x4xf32>
    %27 = arith.truncf %26 : vector<2x4xf32> to vector<2x4xbf16>
    %28 = vector.shape_cast %27 : vector<2x4xbf16> to vector<1x2x4xbf16>
    %29 = vector.shape_cast %28 : vector<1x2x4xbf16> to vector<1x2x4xbf16>
    %30 = vector.broadcast %29 : vector<1x2x4xbf16> to vector<2x2x4xbf16>
    %cst_13 = arith.constant dense<0.000000e+00> : vector<2x2x64xf32>
    %31 = tpu.matmul %30, %9, %cst_13 {dimension_numbers = #tpu.dot_dimension_numbers<[2], [1], [1], [2], [0, 0, 0, 1, 1, 2], [0], [0]>} : vector<2x2x4xbf16>, vector<2x4x64xbf16>, vector<2x2x64xf32> -> vector<2x2x64xf32>
    %32 = arith.mulf %31, %31 : vector<2x2x64xf32>
    %cst_14 = arith.constant dense<0.000000e+00> : vector<2x2xf32>
    %33 = vector.multi_reduction <add>, %32, %cst_14 [2] : vector<2x2x64xf32> to vector<2x2xf32>
    %34 = vector.shape_cast %33 : vector<2x2xf32> to vector<2x2x1xf32>
    %cst_15 = arith.constant 1.000000e-24 : f32
    %35 = vector.broadcast %cst_15 : f32 to vector<2x2x1xf32>
    %36 = arith.maximumf %34, %35 : vector<2x2x1xf32>
    %37 = math.rsqrt %36 : vector<2x2x1xf32>
    %38 = vector.broadcast %37 : vector<2x2x1xf32> to vector<2x2x64xf32>
    %39 = arith.mulf %31, %38 : vector<2x2x64xf32>
    %40 = arith.truncf %39 : vector<2x2x64xf32> to vector<2x2x64xbf16>
    %cst_16 = arith.constant dense<0.000000e+00> : vector<2x2x2xf32>
    %41 = tpu.matmul %40, %40, %cst_16 {dimension_numbers = #tpu.dot_dimension_numbers<[2], [2], [1], [1], [0, 0, 0, 1, 1, 1], [0], [0]>} : vector<2x2x64xbf16>, vector<2x2x64xbf16>, vector<2x2x2xf32> -> vector<2x2x2xf32>
    %cst_17 = arith.constant dense<0.000000e+00> : vector<2x2xf32>
    %42 = vector.multi_reduction <add>, %41, %cst_17 [2] : vector<2x2x2xf32> to vector<2x2xf32>
    %cst_18 = arith.constant dense<0xFF800000> : vector<2xf32>
    %43 = vector.multi_reduction <maximumf>, %42, %cst_18 [1] : vector<2x2xf32> to vector<2xf32>
    %44 = vector.shape_cast %43 : vector<2xf32> to vector<2x1xf32>
    %45 = vector.broadcast %44 : vector<2x1xf32> to vector<2x2xf32>
    %46 = arith.subf %42, %45 : vector<2x2xf32>
    %47 = math.exp %46 : vector<2x2xf32>
    %cst_19 = arith.constant dense<0.000000e+00> : vector<2xf32>
    %48 = vector.multi_reduction <add>, %47, %cst_19 [1] : vector<2x2xf32> to vector<2xf32>
    %49 = vector.shape_cast %48 : vector<2xf32> to vector<2x1xf32>
    %50 = vector.broadcast %49 : vector<2x1xf32> to vector<2x2xf32>
    %51 = arith.divf %47, %50 : vector<2x2xf32>
    %52 = vector.shape_cast %51 : vector<2x2xf32> to vector<2x1x2xf32>
    %cst_20 = arith.constant dense<0.000000e+00> : vector<2x1x64xf32>
    %53 = tpu.matmul %52, %39, %cst_20 {dimension_numbers = #tpu.dot_dimension_numbers<[2], [1], [1], [2], [0, 0, 0, 1, 1, 2], [0], [0]>} : vector<2x1x2xf32>, vector<2x2x64xf32>, vector<2x1x64xf32> -> vector<2x1x64xf32>
    %54 = vector.shape_cast %53 : vector<2x1x64xf32> to vector<2x64xf32>
    %cst_21 = arith.constant dense<0x7F800000> : vector<2xf32>
    %55 = vector.multi_reduction <minimumf>, %54, %cst_21 [1] : vector<2x64xf32> to vector<2xf32>
    %56 = vector.shape_cast %55 : vector<2xf32> to vector<2x1xf32>
    %cst_22 = arith.constant dense<0xFF800000> : vector<2xf32>
    %57 = vector.multi_reduction <maximumf>, %54, %cst_22 [1] : vector<2x64xf32> to vector<2xf32>
    %58 = vector.shape_cast %57 : vector<2xf32> to vector<2x1xf32>
    %59 = vector.broadcast %56 : vector<2x1xf32> to vector<2x64xf32>
    %60 = arith.subf %54, %59 : vector<2x64xf32>
    %61 = arith.subf %58, %56 : vector<2x1xf32>
    %cst_23 = arith.constant 9.99999996E-13 : f32
    %62 = vector.broadcast %cst_23 : f32 to vector<2x1xf32>
    %63 = arith.addf %61, %62 : vector<2x1xf32>
    %64 = vector.broadcast %63 : vector<2x1xf32> to vector<2x64xf32>
    %65 = arith.divf %60, %64 : vector<2x64xf32>
    %c0_24 = arith.constant 0 : index
    %c0_25 = arith.constant 0 : index
    %c0_26 = arith.constant 0 : index
    %66 = vector.load %arg3[%c0_24, %c0_25, %c0_26] : memref<2x2x64xf32, #tpu.memory_space<vmem>>, vector<1x2x64xf32>
    %67 = vector.shape_cast %66 : vector<1x2x64xf32> to vector<2x64xf32>
    %68 = vector.shape_cast %65 : vector<2x64xf32> to vector<1x2x64xf32>
    tpu.vector_store %arg3[%c0_24, %c0_25, %c0_26], %68 {strides = array<i32>} : memref<2x2x64xf32, #tpu.memory_space<vmem>>, vector<1x2x64xf32>,
    %c1 = arith.constant 1 : index
    %c0_27 = arith.constant 0 : index
    %c0_28 = arith.constant 0 : index
    %69 = vector.load %arg1[%c1, %c0_27, %c0_28] : memref<2x2x64xf32, #tpu.memory_space<vmem>>, vector<1x2x64xf32>
    %70 = vector.shape_cast %69 : vector<1x2x64xf32> to vector<2x64xf32>
    %71 = vector.shape_cast %70 : vector<2x64xf32> to vector<2x1x64xf32>
    %72 = vector.broadcast %71 : vector<2x1x64xf32> to vector<2x4x64xf32>
    %73 = arith.mulf %8, %72 : vector<2x4x64xf32>
    %cst_29 = arith.constant dense<0.000000e+00> : vector<2x4xf32>
    %74 = vector.multi_reduction <add>, %73, %cst_29 [2] : vector<2x4x64xf32> to vector<2x4xf32>
    %cst_30 = arith.constant 1.562500e-02 : f32
    %75 = vector.broadcast %cst_30 : f32 to vector<2x4xf32>
    %76 = arith.mulf %74, %75 : vector<2x4xf32>
    %77 = arith.mulf %76, %76 : vector<2x4xf32>
    %cst_31 = arith.constant dense<0.000000e+00> : vector<2xf32>
    %78 = vector.multi_reduction <add>, %77, %cst_31 [1] : vector<2x4xf32> to vector<2xf32>
    %79 = vector.shape_cast %78 : vector<2xf32> to vector<2x1xf32>
    %cst_32 = arith.constant 1.000000e-24 : f32
    %80 = vector.broadcast %cst_32 : f32 to vector<2x1xf32>
    %81 = arith.maximumf %79, %80 : vector<2x1xf32>
    %82 = math.rsqrt %81 : vector<2x1xf32>
    %83 = vector.broadcast %82 : vector<2x1xf32> to vector<2x4xf32>
    %84 = arith.mulf %76, %83 : vector<2x4xf32>
    %85 = arith.truncf %84 : vector<2x4xf32> to vector<2x4xbf16>
    %86 = vector.shape_cast %85 : vector<2x4xbf16> to vector<1x2x4xbf16>
    %87 = vector.shape_cast %86 : vector<1x2x4xbf16> to vector<1x2x4xbf16>
    %88 = vector.broadcast %87 : vector<1x2x4xbf16> to vector<2x2x4xbf16>
    %cst_33 = arith.constant dense<0.000000e+00> : vector<2x2x64xf32>
    %89 = tpu.matmul %88, %9, %cst_33 {dimension_numbers = #tpu.dot_dimension_numbers<[2], [1], [1], [2], [0, 0, 0, 1, 1, 2], [0], [0]>} : vector<2x2x4xbf16>, vector<2x4x64xbf16>, vector<2x2x64xf32> -> vector<2x2x64xf32>
    %90 = arith.mulf %89, %89 : vector<2x2x64xf32>
    %cst_34 = arith.constant dense<0.000000e+00> : vector<2x2xf32>
    %91 = vector.multi_reduction <add>, %90, %cst_34 [2] : vector<2x2x64xf32> to vector<2x2xf32>
    %92 = vector.shape_cast %91 : vector<2x2xf32> to vector<2x2x1xf32>
    %cst_35 = arith.constant 1.000000e-24 : f32
    %93 = vector.broadcast %cst_35 : f32 to vector<2x2x1xf32>
    %94 = arith.maximumf %92, %93 : vector<2x2x1xf32>
    %95 = math.rsqrt %94 : vector<2x2x1xf32>
    %96 = vector.broadcast %95 : vector<2x2x1xf32> to vector<2x2x64xf32>
    %97 = arith.mulf %89, %96 : vector<2x2x64xf32>
    %98 = arith.truncf %97 : vector<2x2x64xf32> to vector<2x2x64xbf16>
    %cst_36 = arith.constant dense<0.000000e+00> : vector<2x2x2xf32>
    %99 = tpu.matmul %98, %98, %cst_36 {dimension_numbers = #tpu.dot_dimension_numbers<[2], [2], [1], [1], [0, 0, 0, 1, 1, 1], [0], [0]>} : vector<2x2x64xbf16>, vector<2x2x64xbf16>, vector<2x2x2xf32> -> vector<2x2x2xf32>
    %cst_37 = arith.constant dense<0.000000e+00> : vector<2x2xf32>
    %100 = vector.multi_reduction <add>, %99, %cst_37 [2] : vector<2x2x2xf32> to vector<2x2xf32>
    %cst_38 = arith.constant dense<0xFF800000> : vector<2xf32>
    %101 = vector.multi_reduction <maximumf>, %100, %cst_38 [1] : vector<2x2xf32> to vector<2xf32>
    %102 = vector.shape_cast %101 : vector<2xf32> to vector<2x1xf32>
    %103 = vector.broadcast %102 : vector<2x1xf32> to vector<2x2xf32>
    %104 = arith.subf %100, %103 : vector<2x2xf32>
    %105 = math.exp %104 : vector<2x2xf32>
    %cst_39 = arith.constant dense<0.000000e+00> : vector<2xf32>
    %106 = vector.multi_reduction <add>, %105, %cst_39 [1] : vector<2x2xf32> to vector<2xf32>
    %107 = vector.shape_cast %106 : vector<2xf32> to vector<2x1xf32>
    %108 = vector.broadcast %107 : vector<2x1xf32> to vector<2x2xf32>
    %109 = arith.divf %105, %108 : vector<2x2xf32>
    %110 = vector.shape_cast %109 : vector<2x2xf32> to vector<2x1x2xf32>
    %cst_40 = arith.constant dense<0.000000e+00> : vector<2x1x64xf32>
    %111 = tpu.matmul %110, %97, %cst_40 {dimension_numbers = #tpu.dot_dimension_numbers<[2], [1], [1], [2], [0, 0, 0, 1, 1, 2], [0], [0]>} : vector<2x1x2xf32>, vector<2x2x64xf32>, vector<2x1x64xf32> -> vector<2x1x64xf32>
    %112 = vector.shape_cast %111 : vector<2x1x64xf32> to vector<2x64xf32>
    %cst_41 = arith.constant dense<0x7F800000> : vector<2xf32>
    %113 = vector.multi_reduction <minimumf>, %112, %cst_41 [1] : vector<2x64xf32> to vector<2xf32>
    %114 = vector.shape_cast %113 : vector<2xf32> to vector<2x1xf32>
    %cst_42 = arith.constant dense<0xFF800000> : vector<2xf32>
    %115 = vector.multi_reduction <maximumf>, %112, %cst_42 [1] : vector<2x64xf32> to vector<2xf32>
    %116 = vector.shape_cast %115 : vector<2xf32> to vector<2x1xf32>
    %117 = vector.broadcast %114 : vector<2x1xf32> to vector<2x64xf32>
    %118 = arith.subf %112, %117 : vector<2x64xf32>
    %119 = arith.subf %116, %114 : vector<2x1xf32>
    %cst_43 = arith.constant 9.99999996E-13 : f32
    %120 = vector.broadcast %cst_43 : f32 to vector<2x1xf32>
    %121 = arith.addf %119, %120 : vector<2x1xf32>
    %122 = vector.broadcast %121 : vector<2x1xf32> to vector<2x64xf32>
    %123 = arith.divf %118, %122 : vector<2x64xf32>
    %c1_44 = arith.constant 1 : index
    %c0_45 = arith.constant 0 : index
    %c0_46 = arith.constant 0 : index
    %124 = vector.load %arg3[%c1_44, %c0_45, %c0_46] : memref<2x2x64xf32, #tpu.memory_space<vmem>>, vector<1x2x64xf32>
    %125 = vector.shape_cast %124 : vector<1x2x64xf32> to vector<2x64xf32>
    %126 = vector.shape_cast %123 : vector<2x64xf32> to vector<1x2x64xf32>
    tpu.vector_store %arg3[%c1_44, %c0_45, %c0_46], %126 {strides = array<i32>} : memref<2x2x64xf32, #tpu.memory_space<vmem>>, vector<1x2x64xf32>,
    return
  }
}

module attributes {stable_mosaic.version = 11 : i64} {
  func.func @kernel(%arg0: i32, %arg1: i32, %arg2: memref<1x4x64xbf16, #tpu.memory_space<vmem>>, %arg3: memref<1x1x4x64xbf16, #tpu.memory_space<vmem>>, %arg4: memref<1x1x1x64xf32, #tpu.memory_space<vmem>>, %arg5: memref<3x3x64x128xbf16, #tpu.memory_space<vmem>>, %arg6: memref<1x128xf32, #tpu.memory_space<vmem>>, %arg7: memref<3x3x128x128xbf16, #tpu.memory_space<vmem>>, %arg8: memref<1x128xf32, #tpu.memory_space<vmem>>, %arg9: memref<64x128xbf16, #tpu.memory_space<vmem>>, %arg10: memref<1x128xf32, #tpu.memory_space<vmem>>, %arg11: memref<1x1x64x128xbf16, #tpu.memory_space<vmem>>, %arg12: memref<102x64xbf16, #tpu.memory_space<vmem>>, %arg13: memref<102x128xbf16, #tpu.memory_space<vmem>>) attributes {dimension_semantics = [#tpu.dimension_semantics<parallel>, #tpu.dimension_semantics<parallel>], iteration_bounds = array<i64: 2, 2>, scalar_prefetch = 0 : i64, scratch_operands = 2 : i64, tpu.core_type = #tpu.core_type<tc>, window_params = [{transform_indices = @transform_0, window_bounds = array<i64: 1, 4, 64>}, {transform_indices = @transform_1, window_bounds = array<i64: 1, 1, 4, 64>}, {transform_indices = @transform_2, window_bounds = array<i64: 1, 1, 1, 64>}, {pipeline_mode = #tpu.pipeline_mode<synchronous>, transform_indices = @transform_3, window_bounds = array<i64: 3, 3, 64, 128>}, {pipeline_mode = #tpu.pipeline_mode<synchronous>, transform_indices = @transform_4, window_bounds = array<i64: 1, 128>}, {pipeline_mode = #tpu.pipeline_mode<synchronous>, transform_indices = @transform_5, window_bounds = array<i64: 3, 3, 128, 128>}, {pipeline_mode = #tpu.pipeline_mode<synchronous>, transform_indices = @transform_6, window_bounds = array<i64: 1, 128>}, {pipeline_mode = #tpu.pipeline_mode<synchronous>, transform_indices = @transform_7, window_bounds = array<i64: 64, 128>}, {pipeline_mode = #tpu.pipeline_mode<synchronous>, transform_indices = @transform_8, window_bounds = array<i64: 1, 128>}, {transform_indices = @transform_9, window_bounds = array<i64: 1, 1, 64, 128>}]} {
    %c0 = arith.constant 0 : index
    %c0_0 = arith.constant 0 : index
    %c0_1 = arith.constant 0 : index
    %0 = vector.load %arg2[%c0, %c0_0, %c0_1] : memref<1x4x64xbf16, #tpu.memory_space<vmem>>, vector<1x4x64xbf16>
    %1 = vector.shape_cast %0 : vector<1x4x64xbf16> to vector<4x64xbf16>
    %c0_2 = arith.constant 0 : index
    %c0_3 = arith.constant 0 : index
    %c0_4 = arith.constant 0 : index
    %c0_5 = arith.constant 0 : index
    %2 = vector.load %arg3[%c0_2, %c0_3, %c0_4, %c0_5] : memref<1x1x4x64xbf16, #tpu.memory_space<vmem>>, vector<1x1x4x64xbf16>
    %3 = vector.shape_cast %2 : vector<1x1x4x64xbf16> to vector<4x64xbf16>
    %c0_6 = arith.constant 0 : index
    %c0_7 = arith.constant 0 : index
    %c0_8 = arith.constant 0 : index
    %c0_9 = arith.constant 0 : index
    %4 = vector.load %arg4[%c0_6, %c0_7, %c0_8, %c0_9] : memref<1x1x1x64xf32, #tpu.memory_space<vmem>>, vector<1x1x1x64xf32>
    %5 = vector.shape_cast %4 : vector<1x1x1x64xf32> to vector<1x64xf32>
    %6 = arith.extf %1 : vector<4x64xbf16> to vector<4x64xf32>
    %7 = vector.broadcast %5 : vector<1x64xf32> to vector<4x64xf32>
    %8 = arith.mulf %6, %7 : vector<4x64xf32>
    %9 = arith.truncf %8 : vector<4x64xf32> to vector<4x64xbf16>
    %cst = arith.constant dense<0.000000e+00> : vector<64x64xf32>
    %10 = tpu.matmul %9, %3, %cst {dimension_numbers = #tpu.dot_dimension_numbers<[0], [0], [1], [1], [0, 1, 1, 1], [], []>} : vector<4x64xbf16>, vector<4x64xbf16>, vector<64x64xf32> -> vector<64x64xf32>
    %11 = arith.truncf %10 : vector<64x64xf32> to vector<64x64xbf16>
    %c0_10 = arith.constant 0 : index
    %c0_11 = arith.constant 0 : index
    %12 = vector.load %arg9[%c0_10, %c0_11] : memref<64x128xbf16, #tpu.memory_space<vmem>>, vector<64x128xbf16>
    %cst_12 = arith.constant dense<0.000000e+00> : vector<64x128xf32>
    %13 = tpu.matmul %11, %12, %cst_12 {dimension_numbers = #tpu.dot_dimension_numbers<[1], [0], [0], [1], [0, 0, 1, 1], [], []>} : vector<64x64xbf16>, vector<64x128xbf16>, vector<64x128xf32> -> vector<64x128xf32>
    %c0_13 = arith.constant 0 : index
    %c0_14 = arith.constant 0 : index
    %14 = vector.load %arg10[%c0_13, %c0_14] : memref<1x128xf32, #tpu.memory_space<vmem>>, vector<1x128xf32>
    %15 = vector.broadcast %14 : vector<1x128xf32> to vector<64x128xf32>
    %16 = arith.addf %13, %15 : vector<64x128xf32>
    %cst_15 = arith.constant 0.000000e+00 : bf16
    %17 = vector.broadcast %cst_15 : bf16 to vector<11x64xbf16>
    %c0_16 = arith.constant 0 : index
    %c0_17 = arith.constant 0 : index
    %18 = vector.load %arg12[%c0_16, %c0_17] : memref<102x64xbf16, #tpu.memory_space<vmem>>, vector<11x64xbf16>
    tpu.vector_store %arg12[%c0_16, %c0_17], %17 {strides = array<i32>} : memref<102x64xbf16, #tpu.memory_space<vmem>>, vector<11x64xbf16>,
    %cst_18 = arith.constant 0.000000e+00 : bf16
    %19 = vector.broadcast %cst_18 : bf16 to vector<2x64xbf16>
    %20 = vector.extract_strided_slice %11 {offsets = [0, 0], sizes = [8, 64], strides = [1, 1]} : vector<64x64xbf16> to vector<8x64xbf16>
    %c11 = arith.constant 11 : index
    %c0_19 = arith.constant 0 : index
    %21 = vector.load %arg12[%c11, %c0_19] : memref<102x64xbf16, #tpu.memory_space<vmem>>, vector<8x64xbf16>
    tpu.vector_store %arg12[%c11, %c0_19], %20 {strides = array<i32>} : memref<102x64xbf16, #tpu.memory_space<vmem>>, vector<8x64xbf16>,
    %c19 = arith.constant 19 : index
    %c0_20 = arith.constant 0 : index
    %22 = vector.load %arg12[%c19, %c0_20] : memref<102x64xbf16, #tpu.memory_space<vmem>>, vector<2x64xbf16>
    tpu.vector_store %arg12[%c19, %c0_20], %19 {strides = array<i32>} : memref<102x64xbf16, #tpu.memory_space<vmem>>, vector<2x64xbf16>,
    %23 = vector.extract_strided_slice %11 {offsets = [8, 0], sizes = [8, 64], strides = [1, 1]} : vector<64x64xbf16> to vector<8x64xbf16>
    %c21 = arith.constant 21 : index
    %c0_21 = arith.constant 0 : index
    %24 = vector.load %arg12[%c21, %c0_21] : memref<102x64xbf16, #tpu.memory_space<vmem>>, vector<8x64xbf16>
    tpu.vector_store %arg12[%c21, %c0_21], %23 {strides = array<i32>} : memref<102x64xbf16, #tpu.memory_space<vmem>>, vector<8x64xbf16>,
    %c29 = arith.constant 29 : index
    %c0_22 = arith.constant 0 : index
    %25 = vector.load %arg12[%c29, %c0_22] : memref<102x64xbf16, #tpu.memory_space<vmem>>, vector<2x64xbf16>
    tpu.vector_store %arg12[%c29, %c0_22], %19 {strides = array<i32>} : memref<102x64xbf16, #tpu.memory_space<vmem>>, vector<2x64xbf16>,
    %26 = vector.extract_strided_slice %11 {offsets = [16, 0], sizes = [8, 64], strides = [1, 1]} : vector<64x64xbf16> to vector<8x64xbf16>
    %c31 = arith.constant 31 : index
    %c0_23 = arith.constant 0 : index
    %27 = vector.load %arg12[%c31, %c0_23] : memref<102x64xbf16, #tpu.memory_space<vmem>>, vector<8x64xbf16>
    tpu.vector_store %arg12[%c31, %c0_23], %26 {strides = array<i32>} : memref<102x64xbf16, #tpu.memory_space<vmem>>, vector<8x64xbf16>,
    %c39 = arith.constant 39 : index
    %c0_24 = arith.constant 0 : index
    %28 = vector.load %arg12[%c39, %c0_24] : memref<102x64xbf16, #tpu.memory_space<vmem>>, vector<2x64xbf16>
    tpu.vector_store %arg12[%c39, %c0_24], %19 {strides = array<i32>} : memref<102x64xbf16, #tpu.memory_space<vmem>>, vector<2x64xbf16>,
    %29 = vector.extract_strided_slice %11 {offsets = [24, 0], sizes = [8, 64], strides = [1, 1]} : vector<64x64xbf16> to vector<8x64xbf16>
    %c41 = arith.constant 41 : index
    %c0_25 = arith.constant 0 : index
    %30 = vector.load %arg12[%c41, %c0_25] : memref<102x64xbf16, #tpu.memory_space<vmem>>, vector<8x64xbf16>
    tpu.vector_store %arg12[%c41, %c0_25], %29 {strides = array<i32>} : memref<102x64xbf16, #tpu.memory_space<vmem>>, vector<8x64xbf16>,
    %c49 = arith.constant 49 : index
    %c0_26 = arith.constant 0 : index
    %31 = vector.load %arg12[%c49, %c0_26] : memref<102x64xbf16, #tpu.memory_space<vmem>>, vector<2x64xbf16>
    tpu.vector_store %arg12[%c49, %c0_26], %19 {strides = array<i32>} : memref<102x64xbf16, #tpu.memory_space<vmem>>, vector<2x64xbf16>,
    %32 = vector.extract_strided_slice %11 {offsets = [32, 0], sizes = [8, 64], strides = [1, 1]} : vector<64x64xbf16> to vector<8x64xbf16>
    %c51 = arith.constant 51 : index
    %c0_27 = arith.constant 0 : index
    %33 = vector.load %arg12[%c51, %c0_27] : memref<102x64xbf16, #tpu.memory_space<vmem>>, vector<8x64xbf16>
    tpu.vector_store %arg12[%c51, %c0_27], %32 {strides = array<i32>} : memref<102x64xbf16, #tpu.memory_space<vmem>>, vector<8x64xbf16>,
    %c59 = arith.constant 59 : index
    %c0_28 = arith.constant 0 : index
    %34 = vector.load %arg12[%c59, %c0_28] : memref<102x64xbf16, #tpu.memory_space<vmem>>, vector<2x64xbf16>
    tpu.vector_store %arg12[%c59, %c0_28], %19 {strides = array<i32>} : memref<102x64xbf16, #tpu.memory_space<vmem>>, vector<2x64xbf16>,
    %35 = vector.extract_strided_slice %11 {offsets = [40, 0], sizes = [8, 64], strides = [1, 1]} : vector<64x64xbf16> to vector<8x64xbf16>
    %c61 = arith.constant 61 : index
    %c0_29 = arith.constant 0 : index
    %36 = vector.load %arg12[%c61, %c0_29] : memref<102x64xbf16, #tpu.memory_space<vmem>>, vector<8x64xbf16>
    tpu.vector_store %arg12[%c61, %c0_29], %35 {strides = array<i32>} : memref<102x64xbf16, #tpu.memory_space<vmem>>, vector<8x64xbf16>,
    %c69 = arith.constant 69 : index
    %c0_30 = arith.constant 0 : index
    %37 = vector.load %arg12[%c69, %c0_30] : memref<102x64xbf16, #tpu.memory_space<vmem>>, vector<2x64xbf16>
    tpu.vector_store %arg12[%c69, %c0_30], %19 {strides = array<i32>} : memref<102x64xbf16, #tpu.memory_space<vmem>>, vector<2x64xbf16>,
    %38 = vector.extract_strided_slice %11 {offsets = [48, 0], sizes = [8, 64], strides = [1, 1]} : vector<64x64xbf16> to vector<8x64xbf16>
    %c71 = arith.constant 71 : index
    %c0_31 = arith.constant 0 : index
    %39 = vector.load %arg12[%c71, %c0_31] : memref<102x64xbf16, #tpu.memory_space<vmem>>, vector<8x64xbf16>
    tpu.vector_store %arg12[%c71, %c0_31], %38 {strides = array<i32>} : memref<102x64xbf16, #tpu.memory_space<vmem>>, vector<8x64xbf16>,
    %c79 = arith.constant 79 : index
    %c0_32 = arith.constant 0 : index
    %40 = vector.load %arg12[%c79, %c0_32] : memref<102x64xbf16, #tpu.memory_space<vmem>>, vector<2x64xbf16>
    tpu.vector_store %arg12[%c79, %c0_32], %19 {strides = array<i32>} : memref<102x64xbf16, #tpu.memory_space<vmem>>, vector<2x64xbf16>,
    %41 = vector.extract_strided_slice %11 {offsets = [56, 0], sizes = [8, 64], strides = [1, 1]} : vector<64x64xbf16> to vector<8x64xbf16>
    %c81 = arith.constant 81 : index
    %c0_33 = arith.constant 0 : index
    %42 = vector.load %arg12[%c81, %c0_33] : memref<102x64xbf16, #tpu.memory_space<vmem>>, vector<8x64xbf16>
    tpu.vector_store %arg12[%c81, %c0_33], %41 {strides = array<i32>} : memref<102x64xbf16, #tpu.memory_space<vmem>>, vector<8x64xbf16>,
    %cst_34 = arith.constant 0.000000e+00 : bf16
    %43 = vector.broadcast %cst_34 : bf16 to vector<13x64xbf16>
    %c89 = arith.constant 89 : index
    %c0_35 = arith.constant 0 : index
    %44 = vector.load %arg12[%c89, %c0_35] : memref<102x64xbf16, #tpu.memory_space<vmem>>, vector<13x64xbf16>
    tpu.vector_store %arg12[%c89, %c0_35], %43 {strides = array<i32>} : memref<102x64xbf16, #tpu.memory_space<vmem>>, vector<13x64xbf16>,
    %cst_36 = arith.constant 0.000000e+00 : f32
    %45 = vector.broadcast %cst_36 : f32 to vector<80x128xf32>
    %c0_37 = arith.constant 0 : index
    %c0_38 = arith.constant 0 : index
    %46 = vector.load %arg12[%c0_37, %c0_38] : memref<102x64xbf16, #tpu.memory_space<vmem>>, vector<80x64xbf16>
    %c0_39 = arith.constant 0 : index
    %c0_40 = arith.constant 0 : index
    %c0_41 = arith.constant 0 : index
    %c0_42 = arith.constant 0 : index
    %47 = vector.load %arg5[%c0_39, %c0_40, %c0_41, %c0_42] : memref<3x3x64x128xbf16, #tpu.memory_space<vmem>>, vector<1x1x64x128xbf16>
    %48 = vector.shape_cast %47 : vector<1x1x64x128xbf16> to vector<64x128xbf16>
    %cst_43 = arith.constant dense<0.000000e+00> : vector<80x128xf32>
    %49 = tpu.matmul %46, %48, %cst_43 {dimension_numbers = #tpu.dot_dimension_numbers<[1], [0], [0], [1], [0, 0, 1, 1], [], []>} : vector<80x64xbf16>, vector<64x128xbf16>, vector<80x128xf32> -> vector<80x128xf32>
    %50 = arith.addf %45, %49 : vector<80x128xf32>
    %c1 = arith.constant 1 : index
    %c0_44 = arith.constant 0 : index
    %51 = vector.load %arg12[%c1, %c0_44] : memref<102x64xbf16, #tpu.memory_space<vmem>>, vector<80x64xbf16>
    %c0_45 = arith.constant 0 : index
    %c1_46 = arith.constant 1 : index
    %c0_47 = arith.constant 0 : index
    %c0_48 = arith.constant 0 : index
    %52 = vector.load %arg5[%c0_45, %c1_46, %c0_47, %c0_48] : memref<3x3x64x128xbf16, #tpu.memory_space<vmem>>, vector<1x1x64x128xbf16>
    %53 = vector.shape_cast %52 : vector<1x1x64x128xbf16> to vector<64x128xbf16>
    %cst_49 = arith.constant dense<0.000000e+00> : vector<80x128xf32>
    %54 = tpu.matmul %51, %53, %cst_49 {dimension_numbers = #tpu.dot_dimension_numbers<[1], [0], [0], [1], [0, 0, 1, 1], [], []>} : vector<80x64xbf16>, vector<64x128xbf16>, vector<80x128xf32> -> vector<80x128xf32>
    %55 = arith.addf %50, %54 : vector<80x128xf32>
    %c2 = arith.constant 2 : index
    %c0_50 = arith.constant 0 : index
    %56 = vector.load %arg12[%c2, %c0_50] : memref<102x64xbf16, #tpu.memory_space<vmem>>, vector<80x64xbf16>
    %c0_51 = arith.constant 0 : index
    %c2_52 = arith.constant 2 : index
    %c0_53 = arith.constant 0 : index
    %c0_54 = arith.constant 0 : index
    %57 = vector.load %arg5[%c0_51, %c2_52, %c0_53, %c0_54] : memref<3x3x64x128xbf16, #tpu.memory_space<vmem>>, vector<1x1x64x128xbf16>
    %58 = vector.shape_cast %57 : vector<1x1x64x128xbf16> to vector<64x128xbf16>
    %cst_55 = arith.constant dense<0.000000e+00> : vector<80x128xf32>
    %59 = tpu.matmul %56, %58, %cst_55 {dimension_numbers = #tpu.dot_dimension_numbers<[1], [0], [0], [1], [0, 0, 1, 1], [], []>} : vector<80x64xbf16>, vector<64x128xbf16>, vector<80x128xf32> -> vector<80x128xf32>
    %60 = arith.addf %55, %59 : vector<80x128xf32>
    %c10 = arith.constant 10 : index
    %c0_56 = arith.constant 0 : index
    %61 = vector.load %arg12[%c10, %c0_56] : memref<102x64xbf16, #tpu.memory_space<vmem>>, vector<80x64xbf16>
    %c1_57 = arith.constant 1 : index
    %c0_58 = arith.constant 0 : index
    %c0_59 = arith.constant 0 : index
    %c0_60 = arith.constant 0 : index
    %62 = vector.load %arg5[%c1_57, %c0_58, %c0_59, %c0_60] : memref<3x3x64x128xbf16, #tpu.memory_space<vmem>>, vector<1x1x64x128xbf16>
    %63 = vector.shape_cast %62 : vector<1x1x64x128xbf16> to vector<64x128xbf16>
    %cst_61 = arith.constant dense<0.000000e+00> : vector<80x128xf32>
    %64 = tpu.matmul %61, %63, %cst_61 {dimension_numbers = #tpu.dot_dimension_numbers<[1], [0], [0], [1], [0, 0, 1, 1], [], []>} : vector<80x64xbf16>, vector<64x128xbf16>, vector<80x128xf32> -> vector<80x128xf32>
    %65 = arith.addf %60, %64 : vector<80x128xf32>
    %c11_62 = arith.constant 11 : index
    %c0_63 = arith.constant 0 : index
    %66 = vector.load %arg12[%c11_62, %c0_63] : memref<102x64xbf16, #tpu.memory_space<vmem>>, vector<80x64xbf16>
    %c1_64 = arith.constant 1 : index
    %c1_65 = arith.constant 1 : index
    %c0_66 = arith.constant 0 : index
    %c0_67 = arith.constant 0 : index
    %67 = vector.load %arg5[%c1_64, %c1_65, %c0_66, %c0_67] : memref<3x3x64x128xbf16, #tpu.memory_space<vmem>>, vector<1x1x64x128xbf16>
    %68 = vector.shape_cast %67 : vector<1x1x64x128xbf16> to vector<64x128xbf16>
    %cst_68 = arith.constant dense<0.000000e+00> : vector<80x128xf32>
    %69 = tpu.matmul %66, %68, %cst_68 {dimension_numbers = #tpu.dot_dimension_numbers<[1], [0], [0], [1], [0, 0, 1, 1], [], []>} : vector<80x64xbf16>, vector<64x128xbf16>, vector<80x128xf32> -> vector<80x128xf32>
    %70 = arith.addf %65, %69 : vector<80x128xf32>
    %c12 = arith.constant 12 : index
    %c0_69 = arith.constant 0 : index
    %71 = vector.load %arg12[%c12, %c0_69] : memref<102x64xbf16, #tpu.memory_space<vmem>>, vector<80x64xbf16>
    %c1_70 = arith.constant 1 : index
    %c2_71 = arith.constant 2 : index
    %c0_72 = arith.constant 0 : index
    %c0_73 = arith.constant 0 : index
    %72 = vector.load %arg5[%c1_70, %c2_71, %c0_72, %c0_73] : memref<3x3x64x128xbf16, #tpu.memory_space<vmem>>, vector<1x1x64x128xbf16>
    %73 = vector.shape_cast %72 : vector<1x1x64x128xbf16> to vector<64x128xbf16>
    %cst_74 = arith.constant dense<0.000000e+00> : vector<80x128xf32>
    %74 = tpu.matmul %71, %73, %cst_74 {dimension_numbers = #tpu.dot_dimension_numbers<[1], [0], [0], [1], [0, 0, 1, 1], [], []>} : vector<80x64xbf16>, vector<64x128xbf16>, vector<80x128xf32> -> vector<80x128xf32>
    %75 = arith.addf %70, %74 : vector<80x128xf32>
    %c20 = arith.constant 20 : index
    %c0_75 = arith.constant 0 : index
    %76 = vector.load %arg12[%c20, %c0_75] : memref<102x64xbf16, #tpu.memory_space<vmem>>, vector<80x64xbf16>
    %c2_76 = arith.constant 2 : index
    %c0_77 = arith.constant 0 : index
    %c0_78 = arith.constant 0 : index
    %c0_79 = arith.constant 0 : index
    %77 = vector.load %arg5[%c2_76, %c0_77, %c0_78, %c0_79] : memref<3x3x64x128xbf16, #tpu.memory_space<vmem>>, vector<1x1x64x128xbf16>
    %78 = vector.shape_cast %77 : vector<1x1x64x128xbf16> to vector<64x128xbf16>
    %cst_80 = arith.constant dense<0.000000e+00> : vector<80x128xf32>
    %79 = tpu.matmul %76, %78, %cst_80 {dimension_numbers = #tpu.dot_dimension_numbers<[1], [0], [0], [1], [0, 0, 1, 1], [], []>} : vector<80x64xbf16>, vector<64x128xbf16>, vector<80x128xf32> -> vector<80x128xf32>
    %80 = arith.addf %75, %79 : vector<80x128xf32>
    %c21_81 = arith.constant 21 : index
    %c0_82 = arith.constant 0 : index
    %81 = vector.load %arg12[%c21_81, %c0_82] : memref<102x64xbf16, #tpu.memory_space<vmem>>, vector<80x64xbf16>
    %c2_83 = arith.constant 2 : index
    %c1_84 = arith.constant 1 : index
    %c0_85 = arith.constant 0 : index
    %c0_86 = arith.constant 0 : index
    %82 = vector.load %arg5[%c2_83, %c1_84, %c0_85, %c0_86] : memref<3x3x64x128xbf16, #tpu.memory_space<vmem>>, vector<1x1x64x128xbf16>
    %83 = vector.shape_cast %82 : vector<1x1x64x128xbf16> to vector<64x128xbf16>
    %cst_87 = arith.constant dense<0.000000e+00> : vector<80x128xf32>
    %84 = tpu.matmul %81, %83, %cst_87 {dimension_numbers = #tpu.dot_dimension_numbers<[1], [0], [0], [1], [0, 0, 1, 1], [], []>} : vector<80x64xbf16>, vector<64x128xbf16>, vector<80x128xf32> -> vector<80x128xf32>
    %85 = arith.addf %80, %84 : vector<80x128xf32>
    %c22 = arith.constant 22 : index
    %c0_88 = arith.constant 0 : index
    %86 = vector.load %arg12[%c22, %c0_88] : memref<102x64xbf16, #tpu.memory_space<vmem>>, vector<80x64xbf16>
    %c2_89 = arith.constant 2 : index
    %c2_90 = arith.constant 2 : index
    %c0_91 = arith.constant 0 : index
    %c0_92 = arith.constant 0 : index
    %87 = vector.load %arg5[%c2_89, %c2_90, %c0_91, %c0_92] : memref<3x3x64x128xbf16, #tpu.memory_space<vmem>>, vector<1x1x64x128xbf16>
    %88 = vector.shape_cast %87 : vector<1x1x64x128xbf16> to vector<64x128xbf16>
    %cst_93 = arith.constant dense<0.000000e+00> : vector<80x128xf32>
    %89 = tpu.matmul %86, %88, %cst_93 {dimension_numbers = #tpu.dot_dimension_numbers<[1], [0], [0], [1], [0, 0, 1, 1], [], []>} : vector<80x64xbf16>, vector<64x128xbf16>, vector<80x128xf32> -> vector<80x128xf32>
    %90 = arith.addf %85, %89 : vector<80x128xf32>
    %c0_94 = arith.constant 0 : index
    %c0_95 = arith.constant 0 : index
    %91 = vector.load %arg6[%c0_94, %c0_95] : memref<1x128xf32, #tpu.memory_space<vmem>>, vector<1x128xf32>
    %92 = vector.broadcast %91 : vector<1x128xf32> to vector<80x128xf32>
    %93 = arith.addf %90, %92 : vector<80x128xf32>
    %cst_96 = arith.constant 0.000000e+00 : f32
    %94 = vector.broadcast %cst_96 : f32 to vector<80x128xf32>
    %95 = arith.maximumf %93, %94 : vector<80x128xf32>
    %96 = arith.truncf %95 : vector<80x128xf32> to vector<80x128xbf16>
    %cst_97 = arith.constant 0.000000e+00 : bf16
    %97 = vector.broadcast %cst_97 : bf16 to vector<11x128xbf16>
    %c0_98 = arith.constant 0 : index
    %c0_99 = arith.constant 0 : index
    %98 = vector.load %arg13[%c0_98, %c0_99] : memref<102x128xbf16, #tpu.memory_space<vmem>>, vector<11x128xbf16>
    tpu.vector_store %arg13[%c0_98, %c0_99], %97 {strides = array<i32>} : memref<102x128xbf16, #tpu.memory_space<vmem>>, vector<11x128xbf16>,
    %cst_100 = arith.constant 0.000000e+00 : bf16
    %99 = vector.broadcast %cst_100 : bf16 to vector<2x128xbf16>
    %100 = vector.extract_strided_slice %96 {offsets = [0, 0], sizes = [8, 128], strides = [1, 1]} : vector<80x128xbf16> to vector<8x128xbf16>
    %c11_101 = arith.constant 11 : index
    %c0_102 = arith.constant 0 : index
    %101 = vector.load %arg13[%c11_101, %c0_102] : memref<102x128xbf16, #tpu.memory_space<vmem>>, vector<8x128xbf16>
    tpu.vector_store %arg13[%c11_101, %c0_102], %100 {strides = array<i32>} : memref<102x128xbf16, #tpu.memory_space<vmem>>, vector<8x128xbf16>,
    %c19_103 = arith.constant 19 : index
    %c0_104 = arith.constant 0 : index
    %102 = vector.load %arg13[%c19_103, %c0_104] : memref<102x128xbf16, #tpu.memory_space<vmem>>, vector<2x128xbf16>
    tpu.vector_store %arg13[%c19_103, %c0_104], %99 {strides = array<i32>} : memref<102x128xbf16, #tpu.memory_space<vmem>>, vector<2x128xbf16>,
    %103 = vector.extract_strided_slice %96 {offsets = [10, 0], sizes = [8, 128], strides = [1, 1]} : vector<80x128xbf16> to vector<8x128xbf16>
    %c21_105 = arith.constant 21 : index
    %c0_106 = arith.constant 0 : index
    %104 = vector.load %arg13[%c21_105, %c0_106] : memref<102x128xbf16, #tpu.memory_space<vmem>>, vector<8x128xbf16>
    tpu.vector_store %arg13[%c21_105, %c0_106], %103 {strides = array<i32>} : memref<102x128xbf16, #tpu.memory_space<vmem>>, vector<8x128xbf16>,
    %c29_107 = arith.constant 29 : index
    %c0_108 = arith.constant 0 : index
    %105 = vector.load %arg13[%c29_107, %c0_108] : memref<102x128xbf16, #tpu.memory_space<vmem>>, vector<2x128xbf16>
    tpu.vector_store %arg13[%c29_107, %c0_108], %99 {strides = array<i32>} : memref<102x128xbf16, #tpu.memory_space<vmem>>, vector<2x128xbf16>,
    %106 = vector.extract_strided_slice %96 {offsets = [20, 0], sizes = [8, 128], strides = [1, 1]} : vector<80x128xbf16> to vector<8x128xbf16>
    %c31_109 = arith.constant 31 : index
    %c0_110 = arith.constant 0 : index
    %107 = vector.load %arg13[%c31_109, %c0_110] : memref<102x128xbf16, #tpu.memory_space<vmem>>, vector<8x128xbf16>
    tpu.vector_store %arg13[%c31_109, %c0_110], %106 {strides = array<i32>} : memref<102x128xbf16, #tpu.memory_space<vmem>>, vector<8x128xbf16>,
    %c39_111 = arith.constant 39 : index
    %c0_112 = arith.constant 0 : index
    %108 = vector.load %arg13[%c39_111, %c0_112] : memref<102x128xbf16, #tpu.memory_space<vmem>>, vector<2x128xbf16>
    tpu.vector_store %arg13[%c39_111, %c0_112], %99 {strides = array<i32>} : memref<102x128xbf16, #tpu.memory_space<vmem>>, vector<2x128xbf16>,
    %109 = vector.extract_strided_slice %96 {offsets = [30, 0], sizes = [8, 128], strides = [1, 1]} : vector<80x128xbf16> to vector<8x128xbf16>
    %c41_113 = arith.constant 41 : index
    %c0_114 = arith.constant 0 : index
    %110 = vector.load %arg13[%c41_113, %c0_114] : memref<102x128xbf16, #tpu.memory_space<vmem>>, vector<8x128xbf16>
    tpu.vector_store %arg13[%c41_113, %c0_114], %109 {strides = array<i32>} : memref<102x128xbf16, #tpu.memory_space<vmem>>, vector<8x128xbf16>,
    %c49_115 = arith.constant 49 : index
    %c0_116 = arith.constant 0 : index
    %111 = vector.load %arg13[%c49_115, %c0_116] : memref<102x128xbf16, #tpu.memory_space<vmem>>, vector<2x128xbf16>
    tpu.vector_store %arg13[%c49_115, %c0_116], %99 {strides = array<i32>} : memref<102x128xbf16, #tpu.memory_space<vmem>>, vector<2x128xbf16>,
    %112 = vector.extract_strided_slice %96 {offsets = [40, 0], sizes = [8, 128], strides = [1, 1]} : vector<80x128xbf16> to vector<8x128xbf16>
    %c51_117 = arith.constant 51 : index
    %c0_118 = arith.constant 0 : index
    %113 = vector.load %arg13[%c51_117, %c0_118] : memref<102x128xbf16, #tpu.memory_space<vmem>>, vector<8x128xbf16>
    tpu.vector_store %arg13[%c51_117, %c0_118], %112 {strides = array<i32>} : memref<102x128xbf16, #tpu.memory_space<vmem>>, vector<8x128xbf16>,
    %c59_119 = arith.constant 59 : index
    %c0_120 = arith.constant 0 : index
    %114 = vector.load %arg13[%c59_119, %c0_120] : memref<102x128xbf16, #tpu.memory_space<vmem>>, vector<2x128xbf16>
    tpu.vector_store %arg13[%c59_119, %c0_120], %99 {strides = array<i32>} : memref<102x128xbf16, #tpu.memory_space<vmem>>, vector<2x128xbf16>,
    %115 = vector.extract_strided_slice %96 {offsets = [50, 0], sizes = [8, 128], strides = [1, 1]} : vector<80x128xbf16> to vector<8x128xbf16>
    %c61_121 = arith.constant 61 : index
    %c0_122 = arith.constant 0 : index
    %116 = vector.load %arg13[%c61_121, %c0_122] : memref<102x128xbf16, #tpu.memory_space<vmem>>, vector<8x128xbf16>
    tpu.vector_store %arg13[%c61_121, %c0_122], %115 {strides = array<i32>} : memref<102x128xbf16, #tpu.memory_space<vmem>>, vector<8x128xbf16>,
    %c69_123 = arith.constant 69 : index
    %c0_124 = arith.constant 0 : index
    %117 = vector.load %arg13[%c69_123, %c0_124] : memref<102x128xbf16, #tpu.memory_space<vmem>>, vector<2x128xbf16>
    tpu.vector_store %arg13[%c69_123, %c0_124], %99 {strides = array<i32>} : memref<102x128xbf16, #tpu.memory_space<vmem>>, vector<2x128xbf16>,
    %118 = vector.extract_strided_slice %96 {offsets = [60, 0], sizes = [8, 128], strides = [1, 1]} : vector<80x128xbf16> to vector<8x128xbf16>
    %c71_125 = arith.constant 71 : index
    %c0_126 = arith.constant 0 : index
    %119 = vector.load %arg13[%c71_125, %c0_126] : memref<102x128xbf16, #tpu.memory_space<vmem>>, vector<8x128xbf16>
    tpu.vector_store %arg13[%c71_125, %c0_126], %118 {strides = array<i32>} : memref<102x128xbf16, #tpu.memory_space<vmem>>, vector<8x128xbf16>,
    %c79_127 = arith.constant 79 : index
    %c0_128 = arith.constant 0 : index
    %120 = vector.load %arg13[%c79_127, %c0_128] : memref<102x128xbf16, #tpu.memory_space<vmem>>, vector<2x128xbf16>
    tpu.vector_store %arg13[%c79_127, %c0_128], %99 {strides = array<i32>} : memref<102x128xbf16, #tpu.memory_space<vmem>>, vector<2x128xbf16>,
    %121 = vector.extract_strided_slice %96 {offsets = [70, 0], sizes = [8, 128], strides = [1, 1]} : vector<80x128xbf16> to vector<8x128xbf16>
    %c81_129 = arith.constant 81 : index
    %c0_130 = arith.constant 0 : index
    %122 = vector.load %arg13[%c81_129, %c0_130] : memref<102x128xbf16, #tpu.memory_space<vmem>>, vector<8x128xbf16>
    tpu.vector_store %arg13[%c81_129, %c0_130], %121 {strides = array<i32>} : memref<102x128xbf16, #tpu.memory_space<vmem>>, vector<8x128xbf16>,
    %cst_131 = arith.constant 0.000000e+00 : bf16
    %123 = vector.broadcast %cst_131 : bf16 to vector<13x128xbf16>
    %c89_132 = arith.constant 89 : index
    %c0_133 = arith.constant 0 : index
    %124 = vector.load %arg13[%c89_132, %c0_133] : memref<102x128xbf16, #tpu.memory_space<vmem>>, vector<13x128xbf16>
    tpu.vector_store %arg13[%c89_132, %c0_133], %123 {strides = array<i32>} : memref<102x128xbf16, #tpu.memory_space<vmem>>, vector<13x128xbf16>,
    %cst_134 = arith.constant 0.000000e+00 : f32
    %125 = vector.broadcast %cst_134 : f32 to vector<80x128xf32>
    %c0_135 = arith.constant 0 : index
    %c0_136 = arith.constant 0 : index
    %126 = vector.load %arg13[%c0_135, %c0_136] : memref<102x128xbf16, #tpu.memory_space<vmem>>, vector<80x128xbf16>
    %c0_137 = arith.constant 0 : index
    %c0_138 = arith.constant 0 : index
    %c0_139 = arith.constant 0 : index
    %c0_140 = arith.constant 0 : index
    %127 = vector.load %arg7[%c0_137, %c0_138, %c0_139, %c0_140] : memref<3x3x128x128xbf16, #tpu.memory_space<vmem>>, vector<1x1x128x128xbf16>
    %128 = vector.shape_cast %127 : vector<1x1x128x128xbf16> to vector<128x128xbf16>
    %cst_141 = arith.constant dense<0.000000e+00> : vector<80x128xf32>
    %129 = tpu.matmul %126, %128, %cst_141 {dimension_numbers = #tpu.dot_dimension_numbers<[1], [0], [0], [1], [0, 0, 1, 1], [], []>} : vector<80x128xbf16>, vector<128x128xbf16>, vector<80x128xf32> -> vector<80x128xf32>
    %130 = arith.addf %125, %129 : vector<80x128xf32>
    %c1_142 = arith.constant 1 : index
    %c0_143 = arith.constant 0 : index
    %131 = vector.load %arg13[%c1_142, %c0_143] : memref<102x128xbf16, #tpu.memory_space<vmem>>, vector<80x128xbf16>
    %c0_144 = arith.constant 0 : index
    %c1_145 = arith.constant 1 : index
    %c0_146 = arith.constant 0 : index
    %c0_147 = arith.constant 0 : index
    %132 = vector.load %arg7[%c0_144, %c1_145, %c0_146, %c0_147] : memref<3x3x128x128xbf16, #tpu.memory_space<vmem>>, vector<1x1x128x128xbf16>
    %133 = vector.shape_cast %132 : vector<1x1x128x128xbf16> to vector<128x128xbf16>
    %cst_148 = arith.constant dense<0.000000e+00> : vector<80x128xf32>
    %134 = tpu.matmul %131, %133, %cst_148 {dimension_numbers = #tpu.dot_dimension_numbers<[1], [0], [0], [1], [0, 0, 1, 1], [], []>} : vector<80x128xbf16>, vector<128x128xbf16>, vector<80x128xf32> -> vector<80x128xf32>
    %135 = arith.addf %130, %134 : vector<80x128xf32>
    %c2_149 = arith.constant 2 : index
    %c0_150 = arith.constant 0 : index
    %136 = vector.load %arg13[%c2_149, %c0_150] : memref<102x128xbf16, #tpu.memory_space<vmem>>, vector<80x128xbf16>
    %c0_151 = arith.constant 0 : index
    %c2_152 = arith.constant 2 : index
    %c0_153 = arith.constant 0 : index
    %c0_154 = arith.constant 0 : index
    %137 = vector.load %arg7[%c0_151, %c2_152, %c0_153, %c0_154] : memref<3x3x128x128xbf16, #tpu.memory_space<vmem>>, vector<1x1x128x128xbf16>
    %138 = vector.shape_cast %137 : vector<1x1x128x128xbf16> to vector<128x128xbf16>
    %cst_155 = arith.constant dense<0.000000e+00> : vector<80x128xf32>
    %139 = tpu.matmul %136, %138, %cst_155 {dimension_numbers = #tpu.dot_dimension_numbers<[1], [0], [0], [1], [0, 0, 1, 1], [], []>} : vector<80x128xbf16>, vector<128x128xbf16>, vector<80x128xf32> -> vector<80x128xf32>
    %140 = arith.addf %135, %139 : vector<80x128xf32>
    %c10_156 = arith.constant 10 : index
    %c0_157 = arith.constant 0 : index
    %141 = vector.load %arg13[%c10_156, %c0_157] : memref<102x128xbf16, #tpu.memory_space<vmem>>, vector<80x128xbf16>
    %c1_158 = arith.constant 1 : index
    %c0_159 = arith.constant 0 : index
    %c0_160 = arith.constant 0 : index
    %c0_161 = arith.constant 0 : index
    %142 = vector.load %arg7[%c1_158, %c0_159, %c0_160, %c0_161] : memref<3x3x128x128xbf16, #tpu.memory_space<vmem>>, vector<1x1x128x128xbf16>
    %143 = vector.shape_cast %142 : vector<1x1x128x128xbf16> to vector<128x128xbf16>
    %cst_162 = arith.constant dense<0.000000e+00> : vector<80x128xf32>
    %144 = tpu.matmul %141, %143, %cst_162 {dimension_numbers = #tpu.dot_dimension_numbers<[1], [0], [0], [1], [0, 0, 1, 1], [], []>} : vector<80x128xbf16>, vector<128x128xbf16>, vector<80x128xf32> -> vector<80x128xf32>
    %145 = arith.addf %140, %144 : vector<80x128xf32>
    %c11_163 = arith.constant 11 : index
    %c0_164 = arith.constant 0 : index
    %146 = vector.load %arg13[%c11_163, %c0_164] : memref<102x128xbf16, #tpu.memory_space<vmem>>, vector<80x128xbf16>
    %c1_165 = arith.constant 1 : index
    %c1_166 = arith.constant 1 : index
    %c0_167 = arith.constant 0 : index
    %c0_168 = arith.constant 0 : index
    %147 = vector.load %arg7[%c1_165, %c1_166, %c0_167, %c0_168] : memref<3x3x128x128xbf16, #tpu.memory_space<vmem>>, vector<1x1x128x128xbf16>
    %148 = vector.shape_cast %147 : vector<1x1x128x128xbf16> to vector<128x128xbf16>
    %cst_169 = arith.constant dense<0.000000e+00> : vector<80x128xf32>
    %149 = tpu.matmul %146, %148, %cst_169 {dimension_numbers = #tpu.dot_dimension_numbers<[1], [0], [0], [1], [0, 0, 1, 1], [], []>} : vector<80x128xbf16>, vector<128x128xbf16>, vector<80x128xf32> -> vector<80x128xf32>
    %150 = arith.addf %145, %149 : vector<80x128xf32>
    %c12_170 = arith.constant 12 : index
    %c0_171 = arith.constant 0 : index
    %151 = vector.load %arg13[%c12_170, %c0_171] : memref<102x128xbf16, #tpu.memory_space<vmem>>, vector<80x128xbf16>
    %c1_172 = arith.constant 1 : index
    %c2_173 = arith.constant 2 : index
    %c0_174 = arith.constant 0 : index
    %c0_175 = arith.constant 0 : index
    %152 = vector.load %arg7[%c1_172, %c2_173, %c0_174, %c0_175] : memref<3x3x128x128xbf16, #tpu.memory_space<vmem>>, vector<1x1x128x128xbf16>
    %153 = vector.shape_cast %152 : vector<1x1x128x128xbf16> to vector<128x128xbf16>
    %cst_176 = arith.constant dense<0.000000e+00> : vector<80x128xf32>
    %154 = tpu.matmul %151, %153, %cst_176 {dimension_numbers = #tpu.dot_dimension_numbers<[1], [0], [0], [1], [0, 0, 1, 1], [], []>} : vector<80x128xbf16>, vector<128x128xbf16>, vector<80x128xf32> -> vector<80x128xf32>
    %155 = arith.addf %150, %154 : vector<80x128xf32>
    %c20_177 = arith.constant 20 : index
    %c0_178 = arith.constant 0 : index
    %156 = vector.load %arg13[%c20_177, %c0_178] : memref<102x128xbf16, #tpu.memory_space<vmem>>, vector<80x128xbf16>
    %c2_179 = arith.constant 2 : index
    %c0_180 = arith.constant 0 : index
    %c0_181 = arith.constant 0 : index
    %c0_182 = arith.constant 0 : index
    %157 = vector.load %arg7[%c2_179, %c0_180, %c0_181, %c0_182] : memref<3x3x128x128xbf16, #tpu.memory_space<vmem>>, vector<1x1x128x128xbf16>
    %158 = vector.shape_cast %157 : vector<1x1x128x128xbf16> to vector<128x128xbf16>
    %cst_183 = arith.constant dense<0.000000e+00> : vector<80x128xf32>
    %159 = tpu.matmul %156, %158, %cst_183 {dimension_numbers = #tpu.dot_dimension_numbers<[1], [0], [0], [1], [0, 0, 1, 1], [], []>} : vector<80x128xbf16>, vector<128x128xbf16>, vector<80x128xf32> -> vector<80x128xf32>
    %160 = arith.addf %155, %159 : vector<80x128xf32>
    %c21_184 = arith.constant 21 : index
    %c0_185 = arith.constant 0 : index
    %161 = vector.load %arg13[%c21_184, %c0_185] : memref<102x128xbf16, #tpu.memory_space<vmem>>, vector<80x128xbf16>
    %c2_186 = arith.constant 2 : index
    %c1_187 = arith.constant 1 : index
    %c0_188 = arith.constant 0 : index
    %c0_189 = arith.constant 0 : index
    %162 = vector.load %arg7[%c2_186, %c1_187, %c0_188, %c0_189] : memref<3x3x128x128xbf16, #tpu.memory_space<vmem>>, vector<1x1x128x128xbf16>
    %163 = vector.shape_cast %162 : vector<1x1x128x128xbf16> to vector<128x128xbf16>
    %cst_190 = arith.constant dense<0.000000e+00> : vector<80x128xf32>
    %164 = tpu.matmul %161, %163, %cst_190 {dimension_numbers = #tpu.dot_dimension_numbers<[1], [0], [0], [1], [0, 0, 1, 1], [], []>} : vector<80x128xbf16>, vector<128x128xbf16>, vector<80x128xf32> -> vector<80x128xf32>
    %165 = arith.addf %160, %164 : vector<80x128xf32>
    %c22_191 = arith.constant 22 : index
    %c0_192 = arith.constant 0 : index
    %166 = vector.load %arg13[%c22_191, %c0_192] : memref<102x128xbf16, #tpu.memory_space<vmem>>, vector<80x128xbf16>
    %c2_193 = arith.constant 2 : index
    %c2_194 = arith.constant 2 : index
    %c0_195 = arith.constant 0 : index
    %c0_196 = arith.constant 0 : index
    %167 = vector.load %arg7[%c2_193, %c2_194, %c0_195, %c0_196] : memref<3x3x128x128xbf16, #tpu.memory_space<vmem>>, vector<1x1x128x128xbf16>
    %168 = vector.shape_cast %167 : vector<1x1x128x128xbf16> to vector<128x128xbf16>
    %cst_197 = arith.constant dense<0.000000e+00> : vector<80x128xf32>
    %169 = tpu.matmul %166, %168, %cst_197 {dimension_numbers = #tpu.dot_dimension_numbers<[1], [0], [0], [1], [0, 0, 1, 1], [], []>} : vector<80x128xbf16>, vector<128x128xbf16>, vector<80x128xf32> -> vector<80x128xf32>
    %170 = arith.addf %165, %169 : vector<80x128xf32>
    %c0_198 = arith.constant 0 : index
    %c0_199 = arith.constant 0 : index
    %171 = vector.load %arg8[%c0_198, %c0_199] : memref<1x128xf32, #tpu.memory_space<vmem>>, vector<1x128xf32>
    %172 = vector.broadcast %171 : vector<1x128xf32> to vector<80x128xf32>
    %173 = arith.addf %170, %172 : vector<80x128xf32>
    %174 = vector.extract_strided_slice %173 {offsets = [0, 0], sizes = [8, 128], strides = [1, 1]} : vector<80x128xf32> to vector<8x128xf32>
    %175 = vector.extract_strided_slice %16 {offsets = [0, 0], sizes = [8, 128], strides = [1, 1]} : vector<64x128xf32> to vector<8x128xf32>
    %176 = arith.addf %174, %175 : vector<8x128xf32>
    %cst_200 = arith.constant 0.000000e+00 : f32
    %177 = vector.broadcast %cst_200 : f32 to vector<8x128xf32>
    %178 = arith.maximumf %176, %177 : vector<8x128xf32>
    %179 = arith.truncf %178 : vector<8x128xf32> to vector<8x128xbf16>
    %c0_i32 = arith.constant 0 : i32
    %c0_i32_201 = arith.constant 0 : i32
    %c0_i32_202 = arith.constant 0 : i32
    %c0_i32_203 = arith.constant 0 : i32
    %180 = tpu.memref_slice %arg11[%c0_i32, %c0_i32_201, %c0_i32_202, %c0_i32_203] : memref<1x1x64x128xbf16, #tpu.memory_space<vmem>> -> memref<1x1x64x128xbf16, #tpu.memory_space<vmem>>
    %181 = tpu.memref_squeeze %180 : memref<1x1x64x128xbf16, #tpu.memory_space<vmem>> -> memref<64x128xbf16, #tpu.memory_space<vmem>>
    %c0_204 = arith.constant 0 : index
    %c0_205 = arith.constant 0 : index
    %182 = vector.load %181[%c0_204, %c0_205] : memref<64x128xbf16, #tpu.memory_space<vmem>>, vector<8x128xbf16>
    tpu.vector_store %181[%c0_204, %c0_205], %179 {strides = array<i32>} : memref<64x128xbf16, #tpu.memory_space<vmem>>, vector<8x128xbf16>,
    %183 = vector.extract_strided_slice %173 {offsets = [10, 0], sizes = [8, 128], strides = [1, 1]} : vector<80x128xf32> to vector<8x128xf32>
    %184 = vector.extract_strided_slice %16 {offsets = [8, 0], sizes = [8, 128], strides = [1, 1]} : vector<64x128xf32> to vector<8x128xf32>
    %185 = arith.addf %183, %184 : vector<8x128xf32>
    %cst_206 = arith.constant 0.000000e+00 : f32
    %186 = vector.broadcast %cst_206 : f32 to vector<8x128xf32>
    %187 = arith.maximumf %185, %186 : vector<8x128xf32>
    %188 = arith.truncf %187 : vector<8x128xf32> to vector<8x128xbf16>
    %c0_i32_207 = arith.constant 0 : i32
    %c0_i32_208 = arith.constant 0 : i32
    %c0_i32_209 = arith.constant 0 : i32
    %c0_i32_210 = arith.constant 0 : i32
    %189 = tpu.memref_slice %arg11[%c0_i32_207, %c0_i32_208, %c0_i32_209, %c0_i32_210] : memref<1x1x64x128xbf16, #tpu.memory_space<vmem>> -> memref<1x1x64x128xbf16, #tpu.memory_space<vmem>>
    %190 = tpu.memref_squeeze %189 : memref<1x1x64x128xbf16, #tpu.memory_space<vmem>> -> memref<64x128xbf16, #tpu.memory_space<vmem>>
    %c8 = arith.constant 8 : index
    %c0_211 = arith.constant 0 : index
    %191 = vector.load %190[%c8, %c0_211] : memref<64x128xbf16, #tpu.memory_space<vmem>>, vector<8x128xbf16>
    tpu.vector_store %190[%c8, %c0_211], %188 {strides = array<i32>} : memref<64x128xbf16, #tpu.memory_space<vmem>>, vector<8x128xbf16>,
    %192 = vector.extract_strided_slice %173 {offsets = [20, 0], sizes = [8, 128], strides = [1, 1]} : vector<80x128xf32> to vector<8x128xf32>
    %193 = vector.extract_strided_slice %16 {offsets = [16, 0], sizes = [8, 128], strides = [1, 1]} : vector<64x128xf32> to vector<8x128xf32>
    %194 = arith.addf %192, %193 : vector<8x128xf32>
    %cst_212 = arith.constant 0.000000e+00 : f32
    %195 = vector.broadcast %cst_212 : f32 to vector<8x128xf32>
    %196 = arith.maximumf %194, %195 : vector<8x128xf32>
    %197 = arith.truncf %196 : vector<8x128xf32> to vector<8x128xbf16>
    %c0_i32_213 = arith.constant 0 : i32
    %c0_i32_214 = arith.constant 0 : i32
    %c0_i32_215 = arith.constant 0 : i32
    %c0_i32_216 = arith.constant 0 : i32
    %198 = tpu.memref_slice %arg11[%c0_i32_213, %c0_i32_214, %c0_i32_215, %c0_i32_216] : memref<1x1x64x128xbf16, #tpu.memory_space<vmem>> -> memref<1x1x64x128xbf16, #tpu.memory_space<vmem>>
    %199 = tpu.memref_squeeze %198 : memref<1x1x64x128xbf16, #tpu.memory_space<vmem>> -> memref<64x128xbf16, #tpu.memory_space<vmem>>
    %c16 = arith.constant 16 : index
    %c0_217 = arith.constant 0 : index
    %200 = vector.load %199[%c16, %c0_217] : memref<64x128xbf16, #tpu.memory_space<vmem>>, vector<8x128xbf16>
    tpu.vector_store %199[%c16, %c0_217], %197 {strides = array<i32>} : memref<64x128xbf16, #tpu.memory_space<vmem>>, vector<8x128xbf16>,
    %201 = vector.extract_strided_slice %173 {offsets = [30, 0], sizes = [8, 128], strides = [1, 1]} : vector<80x128xf32> to vector<8x128xf32>
    %202 = vector.extract_strided_slice %16 {offsets = [24, 0], sizes = [8, 128], strides = [1, 1]} : vector<64x128xf32> to vector<8x128xf32>
    %203 = arith.addf %201, %202 : vector<8x128xf32>
    %cst_218 = arith.constant 0.000000e+00 : f32
    %204 = vector.broadcast %cst_218 : f32 to vector<8x128xf32>
    %205 = arith.maximumf %203, %204 : vector<8x128xf32>
    %206 = arith.truncf %205 : vector<8x128xf32> to vector<8x128xbf16>
    %c0_i32_219 = arith.constant 0 : i32
    %c0_i32_220 = arith.constant 0 : i32
    %c0_i32_221 = arith.constant 0 : i32
    %c0_i32_222 = arith.constant 0 : i32
    %207 = tpu.memref_slice %arg11[%c0_i32_219, %c0_i32_220, %c0_i32_221, %c0_i32_222] : memref<1x1x64x128xbf16, #tpu.memory_space<vmem>> -> memref<1x1x64x128xbf16, #tpu.memory_space<vmem>>
    %208 = tpu.memref_squeeze %207 : memref<1x1x64x128xbf16, #tpu.memory_space<vmem>> -> memref<64x128xbf16, #tpu.memory_space<vmem>>
    %c24 = arith.constant 24 : index
    %c0_223 = arith.constant 0 : index
    %209 = vector.load %208[%c24, %c0_223] : memref<64x128xbf16, #tpu.memory_space<vmem>>, vector<8x128xbf16>
    tpu.vector_store %208[%c24, %c0_223], %206 {strides = array<i32>} : memref<64x128xbf16, #tpu.memory_space<vmem>>, vector<8x128xbf16>,
    %210 = vector.extract_strided_slice %173 {offsets = [40, 0], sizes = [8, 128], strides = [1, 1]} : vector<80x128xf32> to vector<8x128xf32>
    %211 = vector.extract_strided_slice %16 {offsets = [32, 0], sizes = [8, 128], strides = [1, 1]} : vector<64x128xf32> to vector<8x128xf32>
    %212 = arith.addf %210, %211 : vector<8x128xf32>
    %cst_224 = arith.constant 0.000000e+00 : f32
    %213 = vector.broadcast %cst_224 : f32 to vector<8x128xf32>
    %214 = arith.maximumf %212, %213 : vector<8x128xf32>
    %215 = arith.truncf %214 : vector<8x128xf32> to vector<8x128xbf16>
    %c0_i32_225 = arith.constant 0 : i32
    %c0_i32_226 = arith.constant 0 : i32
    %c0_i32_227 = arith.constant 0 : i32
    %c0_i32_228 = arith.constant 0 : i32
    %216 = tpu.memref_slice %arg11[%c0_i32_225, %c0_i32_226, %c0_i32_227, %c0_i32_228] : memref<1x1x64x128xbf16, #tpu.memory_space<vmem>> -> memref<1x1x64x128xbf16, #tpu.memory_space<vmem>>
    %217 = tpu.memref_squeeze %216 : memref<1x1x64x128xbf16, #tpu.memory_space<vmem>> -> memref<64x128xbf16, #tpu.memory_space<vmem>>
    %c32 = arith.constant 32 : index
    %c0_229 = arith.constant 0 : index
    %218 = vector.load %217[%c32, %c0_229] : memref<64x128xbf16, #tpu.memory_space<vmem>>, vector<8x128xbf16>
    tpu.vector_store %217[%c32, %c0_229], %215 {strides = array<i32>} : memref<64x128xbf16, #tpu.memory_space<vmem>>, vector<8x128xbf16>,
    %219 = vector.extract_strided_slice %173 {offsets = [50, 0], sizes = [8, 128], strides = [1, 1]} : vector<80x128xf32> to vector<8x128xf32>
    %220 = vector.extract_strided_slice %16 {offsets = [40, 0], sizes = [8, 128], strides = [1, 1]} : vector<64x128xf32> to vector<8x128xf32>
    %221 = arith.addf %219, %220 : vector<8x128xf32>
    %cst_230 = arith.constant 0.000000e+00 : f32
    %222 = vector.broadcast %cst_230 : f32 to vector<8x128xf32>
    %223 = arith.maximumf %221, %222 : vector<8x128xf32>
    %224 = arith.truncf %223 : vector<8x128xf32> to vector<8x128xbf16>
    %c0_i32_231 = arith.constant 0 : i32
    %c0_i32_232 = arith.constant 0 : i32
    %c0_i32_233 = arith.constant 0 : i32
    %c0_i32_234 = arith.constant 0 : i32
    %225 = tpu.memref_slice %arg11[%c0_i32_231, %c0_i32_232, %c0_i32_233, %c0_i32_234] : memref<1x1x64x128xbf16, #tpu.memory_space<vmem>> -> memref<1x1x64x128xbf16, #tpu.memory_space<vmem>>
    %226 = tpu.memref_squeeze %225 : memref<1x1x64x128xbf16, #tpu.memory_space<vmem>> -> memref<64x128xbf16, #tpu.memory_space<vmem>>
    %c40 = arith.constant 40 : index
    %c0_235 = arith.constant 0 : index
    %227 = vector.load %226[%c40, %c0_235] : memref<64x128xbf16, #tpu.memory_space<vmem>>, vector<8x128xbf16>
    tpu.vector_store %226[%c40, %c0_235], %224 {strides = array<i32>} : memref<64x128xbf16, #tpu.memory_space<vmem>>, vector<8x128xbf16>,
    %228 = vector.extract_strided_slice %173 {offsets = [60, 0], sizes = [8, 128], strides = [1, 1]} : vector<80x128xf32> to vector<8x128xf32>
    %229 = vector.extract_strided_slice %16 {offsets = [48, 0], sizes = [8, 128], strides = [1, 1]} : vector<64x128xf32> to vector<8x128xf32>
    %230 = arith.addf %228, %229 : vector<8x128xf32>
    %cst_236 = arith.constant 0.000000e+00 : f32
    %231 = vector.broadcast %cst_236 : f32 to vector<8x128xf32>
    %232 = arith.maximumf %230, %231 : vector<8x128xf32>
    %233 = arith.truncf %232 : vector<8x128xf32> to vector<8x128xbf16>
    %c0_i32_237 = arith.constant 0 : i32
    %c0_i32_238 = arith.constant 0 : i32
    %c0_i32_239 = arith.constant 0 : i32
    %c0_i32_240 = arith.constant 0 : i32
    %234 = tpu.memref_slice %arg11[%c0_i32_237, %c0_i32_238, %c0_i32_239, %c0_i32_240] : memref<1x1x64x128xbf16, #tpu.memory_space<vmem>> -> memref<1x1x64x128xbf16, #tpu.memory_space<vmem>>
    %235 = tpu.memref_squeeze %234 : memref<1x1x64x128xbf16, #tpu.memory_space<vmem>> -> memref<64x128xbf16, #tpu.memory_space<vmem>>
    %c48 = arith.constant 48 : index
    %c0_241 = arith.constant 0 : index
    %236 = vector.load %235[%c48, %c0_241] : memref<64x128xbf16, #tpu.memory_space<vmem>>, vector<8x128xbf16>
    tpu.vector_store %235[%c48, %c0_241], %233 {strides = array<i32>} : memref<64x128xbf16, #tpu.memory_space<vmem>>, vector<8x128xbf16>,
    %237 = vector.extract_strided_slice %173 {offsets = [70, 0], sizes = [8, 128], strides = [1, 1]} : vector<80x128xf32> to vector<8x128xf32>
    %238 = vector.extract_strided_slice %16 {offsets = [56, 0], sizes = [8, 128], strides = [1, 1]} : vector<64x128xf32> to vector<8x128xf32>
    %239 = arith.addf %237, %238 : vector<8x128xf32>
    %cst_242 = arith.constant 0.000000e+00 : f32
    %240 = vector.broadcast %cst_242 : f32 to vector<8x128xf32>
    %241 = arith.maximumf %239, %240 : vector<8x128xf32>
    %242 = arith.truncf %241 : vector<8x128xf32> to vector<8x128xbf16>
    %c0_i32_243 = arith.constant 0 : i32
    %c0_i32_244 = arith.constant 0 : i32
    %c0_i32_245 = arith.constant 0 : i32
    %c0_i32_246 = arith.constant 0 : i32
    %243 = tpu.memref_slice %arg11[%c0_i32_243, %c0_i32_244, %c0_i32_245, %c0_i32_246] : memref<1x1x64x128xbf16, #tpu.memory_space<vmem>> -> memref<1x1x64x128xbf16, #tpu.memory_space<vmem>>
    %244 = tpu.memref_squeeze %243 : memref<1x1x64x128xbf16, #tpu.memory_space<vmem>> -> memref<64x128xbf16, #tpu.memory_space<vmem>>
    %c56 = arith.constant 56 : index
    %c0_247 = arith.constant 0 : index
    %245 = vector.load %244[%c56, %c0_247] : memref<64x128xbf16, #tpu.memory_space<vmem>>, vector<8x128xbf16>
    tpu.vector_store %244[%c56, %c0_247], %242 {strides = array<i32>} : memref<64x128xbf16, #tpu.memory_space<vmem>>, vector<8x128xbf16>,
    return
  }
  func.func @transform_0(%arg0: i32, %arg1: i32) -> (i32, i32, i32) {
    %c0_i32 = arith.constant 0 : i32
    %c0_i32_0 = arith.constant 0 : i32
    %c0_i32_1 = arith.constant 0 : i32
    return %arg1, %c0_i32, %c0_i32_0 : i32, i32, i32
  }
  func.func @transform_1(%arg0: i32, %arg1: i32) -> (i32, i32, i32, i32) {
    %c0_i32 = arith.constant 0 : i32
    %c0_i32_0 = arith.constant 0 : i32
    %c0_i32_1 = arith.constant 0 : i32
    return %arg0, %arg1, %c0_i32, %c0_i32_0 : i32, i32, i32, i32
  }
  func.func @transform_2(%arg0: i32, %arg1: i32) -> (i32, i32, i32, i32) {
    %c0_i32 = arith.constant 0 : i32
    %c0_i32_0 = arith.constant 0 : i32
    %c0_i32_1 = arith.constant 0 : i32
    return %arg0, %arg1, %c0_i32, %c0_i32_0 : i32, i32, i32, i32
  }
  func.func @transform_3(%arg0: i32, %arg1: i32) -> (i32, i32, i32, i32) {
    %c0_i32 = arith.constant 0 : i32
    %c0_i32_0 = arith.constant 0 : i32
    %c0_i32_1 = arith.constant 0 : i32
    %c0_i32_2 = arith.constant 0 : i32
    %c0_i32_3 = arith.constant 0 : i32
    return %c0_i32, %c0_i32_0, %c0_i32_1, %c0_i32_2 : i32, i32, i32, i32
  }
  func.func @transform_4(%arg0: i32, %arg1: i32) -> (i32, i32) {
    %c0_i32 = arith.constant 0 : i32
    %c0_i32_0 = arith.constant 0 : i32
    %c0_i32_1 = arith.constant 0 : i32
    return %c0_i32, %c0_i32_0 : i32, i32
  }
  func.func @transform_5(%arg0: i32, %arg1: i32) -> (i32, i32, i32, i32) {
    %c0_i32 = arith.constant 0 : i32
    %c0_i32_0 = arith.constant 0 : i32
    %c0_i32_1 = arith.constant 0 : i32
    %c0_i32_2 = arith.constant 0 : i32
    %c0_i32_3 = arith.constant 0 : i32
    return %c0_i32, %c0_i32_0, %c0_i32_1, %c0_i32_2 : i32, i32, i32, i32
  }
  func.func @transform_6(%arg0: i32, %arg1: i32) -> (i32, i32) {
    %c0_i32 = arith.constant 0 : i32
    %c0_i32_0 = arith.constant 0 : i32
    %c0_i32_1 = arith.constant 0 : i32
    return %c0_i32, %c0_i32_0 : i32, i32
  }
  func.func @transform_7(%arg0: i32, %arg1: i32) -> (i32, i32) {
    %c0_i32 = arith.constant 0 : i32
    %c0_i32_0 = arith.constant 0 : i32
    %c0_i32_1 = arith.constant 0 : i32
    return %c0_i32, %c0_i32_0 : i32, i32
  }
  func.func @transform_8(%arg0: i32, %arg1: i32) -> (i32, i32) {
    %c0_i32 = arith.constant 0 : i32
    %c0_i32_0 = arith.constant 0 : i32
    %c0_i32_1 = arith.constant 0 : i32
    return %c0_i32, %c0_i32_0 : i32, i32
  }
  func.func @transform_9(%arg0: i32, %arg1: i32) -> (i32, i32, i32, i32) {
    %c0_i32 = arith.constant 0 : i32
    %c0_i32_0 = arith.constant 0 : i32
    %c0_i32_1 = arith.constant 0 : i32
    return %arg0, %arg1, %c0_i32, %c0_i32_0 : i32, i32, i32, i32
  }
}

module attributes {stable_mosaic.version = 11 : i64} {
  func.func @kernel(%arg0: i32, %arg1: memref<1x1x64x128xbf16, #tpu.memory_space<vmem>>, %arg2: memref<1x1x64x128xbf16, #tpu.memory_space<vmem>>, %arg3: memref<3x3x256x128xbf16, #tpu.memory_space<vmem>>, %arg4: memref<1x128xf32, #tpu.memory_space<vmem>>, %arg5: memref<3x3x128x128xbf16, #tpu.memory_space<vmem>>, %arg6: memref<1x128xf32, #tpu.memory_space<vmem>>, %arg7: memref<256x128xbf16, #tpu.memory_space<vmem>>, %arg8: memref<1x128xf32, #tpu.memory_space<vmem>>, %arg9: memref<1x64x128xf32, #tpu.memory_space<vmem>>, %arg10: memref<102x256xbf16, #tpu.memory_space<vmem>>, %arg11: memref<102x128xbf16, #tpu.memory_space<vmem>>) attributes {dimension_semantics = [#tpu.dimension_semantics<parallel>], iteration_bounds = array<i64: 2>, scalar_prefetch = 0 : i64, scratch_operands = 2 : i64, tpu.core_type = #tpu.core_type<tc>, window_params = [{transform_indices = @transform_0, window_bounds = array<i64: 1, 1, 64, 128>}, {transform_indices = @transform_1, window_bounds = array<i64: 1, 1, 64, 128>}, {pipeline_mode = #tpu.pipeline_mode<synchronous>, transform_indices = @transform_2, window_bounds = array<i64: 3, 3, 256, 128>}, {pipeline_mode = #tpu.pipeline_mode<synchronous>, transform_indices = @transform_3, window_bounds = array<i64: 1, 128>}, {pipeline_mode = #tpu.pipeline_mode<synchronous>, transform_indices = @transform_4, window_bounds = array<i64: 3, 3, 128, 128>}, {pipeline_mode = #tpu.pipeline_mode<synchronous>, transform_indices = @transform_5, window_bounds = array<i64: 1, 128>}, {pipeline_mode = #tpu.pipeline_mode<synchronous>, transform_indices = @transform_6, window_bounds = array<i64: 256, 128>}, {pipeline_mode = #tpu.pipeline_mode<synchronous>, transform_indices = @transform_7, window_bounds = array<i64: 1, 128>}, {transform_indices = @transform_8, window_bounds = array<i64: 1, 64, 128>}]} {
    %c0 = arith.constant 0 : index
    %c0_0 = arith.constant 0 : index
    %c0_1 = arith.constant 0 : index
    %c0_2 = arith.constant 0 : index
    %0 = vector.load %arg1[%c0, %c0_0, %c0_1, %c0_2] : memref<1x1x64x128xbf16, #tpu.memory_space<vmem>>, vector<1x1x64x128xbf16>
    %1 = vector.shape_cast %0 : vector<1x1x64x128xbf16> to vector<64x128xbf16>
    %c0_3 = arith.constant 0 : index
    %c0_4 = arith.constant 0 : index
    %c0_5 = arith.constant 0 : index
    %c0_6 = arith.constant 0 : index
    %2 = vector.load %arg2[%c0_3, %c0_4, %c0_5, %c0_6] : memref<1x1x64x128xbf16, #tpu.memory_space<vmem>>, vector<1x1x64x128xbf16>
    %3 = vector.shape_cast %2 : vector<1x1x64x128xbf16> to vector<64x128xbf16>
    %4 = tpu.concatenate %1, %3 in 1 : vector<64x128xbf16>, vector<64x128xbf16> -> vector<64x256xbf16>
    %c0_7 = arith.constant 0 : index
    %c0_8 = arith.constant 0 : index
    %5 = vector.load %arg7[%c0_7, %c0_8] : memref<256x128xbf16, #tpu.memory_space<vmem>>, vector<256x128xbf16>
    %cst = arith.constant dense<0.000000e+00> : vector<64x128xf32>
    %6 = tpu.matmul %4, %5, %cst {dimension_numbers = #tpu.dot_dimension_numbers<[1], [0], [0], [1], [0, 0, 1, 1], [], []>} : vector<64x256xbf16>, vector<256x128xbf16>, vector<64x128xf32> -> vector<64x128xf32>
    %c0_9 = arith.constant 0 : index
    %c0_10 = arith.constant 0 : index
    %7 = vector.load %arg8[%c0_9, %c0_10] : memref<1x128xf32, #tpu.memory_space<vmem>>, vector<1x128xf32>
    %8 = vector.broadcast %7 : vector<1x128xf32> to vector<64x128xf32>
    %9 = arith.addf %6, %8 : vector<64x128xf32>
    %cst_11 = arith.constant 0.000000e+00 : bf16
    %10 = vector.broadcast %cst_11 : bf16 to vector<11x256xbf16>
    %c0_12 = arith.constant 0 : index
    %c0_13 = arith.constant 0 : index
    %11 = vector.load %arg10[%c0_12, %c0_13] : memref<102x256xbf16, #tpu.memory_space<vmem>>, vector<11x256xbf16>
    tpu.vector_store %arg10[%c0_12, %c0_13], %10 {strides = array<i32>} : memref<102x256xbf16, #tpu.memory_space<vmem>>, vector<11x256xbf16>,
    %cst_14 = arith.constant 0.000000e+00 : bf16
    %12 = vector.broadcast %cst_14 : bf16 to vector<2x256xbf16>
    %13 = vector.extract_strided_slice %4 {offsets = [0, 0], sizes = [8, 256], strides = [1, 1]} : vector<64x256xbf16> to vector<8x256xbf16>
    %c11 = arith.constant 11 : index
    %c0_15 = arith.constant 0 : index
    %14 = vector.load %arg10[%c11, %c0_15] : memref<102x256xbf16, #tpu.memory_space<vmem>>, vector<8x256xbf16>
    tpu.vector_store %arg10[%c11, %c0_15], %13 {strides = array<i32>} : memref<102x256xbf16, #tpu.memory_space<vmem>>, vector<8x256xbf16>,
    %c19 = arith.constant 19 : index
    %c0_16 = arith.constant 0 : index
    %15 = vector.load %arg10[%c19, %c0_16] : memref<102x256xbf16, #tpu.memory_space<vmem>>, vector<2x256xbf16>
    tpu.vector_store %arg10[%c19, %c0_16], %12 {strides = array<i32>} : memref<102x256xbf16, #tpu.memory_space<vmem>>, vector<2x256xbf16>,
    %16 = vector.extract_strided_slice %4 {offsets = [8, 0], sizes = [8, 256], strides = [1, 1]} : vector<64x256xbf16> to vector<8x256xbf16>
    %c21 = arith.constant 21 : index
    %c0_17 = arith.constant 0 : index
    %17 = vector.load %arg10[%c21, %c0_17] : memref<102x256xbf16, #tpu.memory_space<vmem>>, vector<8x256xbf16>
    tpu.vector_store %arg10[%c21, %c0_17], %16 {strides = array<i32>} : memref<102x256xbf16, #tpu.memory_space<vmem>>, vector<8x256xbf16>,
    %c29 = arith.constant 29 : index
    %c0_18 = arith.constant 0 : index
    %18 = vector.load %arg10[%c29, %c0_18] : memref<102x256xbf16, #tpu.memory_space<vmem>>, vector<2x256xbf16>
    tpu.vector_store %arg10[%c29, %c0_18], %12 {strides = array<i32>} : memref<102x256xbf16, #tpu.memory_space<vmem>>, vector<2x256xbf16>,
    %19 = vector.extract_strided_slice %4 {offsets = [16, 0], sizes = [8, 256], strides = [1, 1]} : vector<64x256xbf16> to vector<8x256xbf16>
    %c31 = arith.constant 31 : index
    %c0_19 = arith.constant 0 : index
    %20 = vector.load %arg10[%c31, %c0_19] : memref<102x256xbf16, #tpu.memory_space<vmem>>, vector<8x256xbf16>
    tpu.vector_store %arg10[%c31, %c0_19], %19 {strides = array<i32>} : memref<102x256xbf16, #tpu.memory_space<vmem>>, vector<8x256xbf16>,
    %c39 = arith.constant 39 : index
    %c0_20 = arith.constant 0 : index
    %21 = vector.load %arg10[%c39, %c0_20] : memref<102x256xbf16, #tpu.memory_space<vmem>>, vector<2x256xbf16>
    tpu.vector_store %arg10[%c39, %c0_20], %12 {strides = array<i32>} : memref<102x256xbf16, #tpu.memory_space<vmem>>, vector<2x256xbf16>,
    %22 = vector.extract_strided_slice %4 {offsets = [24, 0], sizes = [8, 256], strides = [1, 1]} : vector<64x256xbf16> to vector<8x256xbf16>
    %c41 = arith.constant 41 : index
    %c0_21 = arith.constant 0 : index
    %23 = vector.load %arg10[%c41, %c0_21] : memref<102x256xbf16, #tpu.memory_space<vmem>>, vector<8x256xbf16>
    tpu.vector_store %arg10[%c41, %c0_21], %22 {strides = array<i32>} : memref<102x256xbf16, #tpu.memory_space<vmem>>, vector<8x256xbf16>,
    %c49 = arith.constant 49 : index
    %c0_22 = arith.constant 0 : index
    %24 = vector.load %arg10[%c49, %c0_22] : memref<102x256xbf16, #tpu.memory_space<vmem>>, vector<2x256xbf16>
    tpu.vector_store %arg10[%c49, %c0_22], %12 {strides = array<i32>} : memref<102x256xbf16, #tpu.memory_space<vmem>>, vector<2x256xbf16>,
    %25 = vector.extract_strided_slice %4 {offsets = [32, 0], sizes = [8, 256], strides = [1, 1]} : vector<64x256xbf16> to vector<8x256xbf16>
    %c51 = arith.constant 51 : index
    %c0_23 = arith.constant 0 : index
    %26 = vector.load %arg10[%c51, %c0_23] : memref<102x256xbf16, #tpu.memory_space<vmem>>, vector<8x256xbf16>
    tpu.vector_store %arg10[%c51, %c0_23], %25 {strides = array<i32>} : memref<102x256xbf16, #tpu.memory_space<vmem>>, vector<8x256xbf16>,
    %c59 = arith.constant 59 : index
    %c0_24 = arith.constant 0 : index
    %27 = vector.load %arg10[%c59, %c0_24] : memref<102x256xbf16, #tpu.memory_space<vmem>>, vector<2x256xbf16>
    tpu.vector_store %arg10[%c59, %c0_24], %12 {strides = array<i32>} : memref<102x256xbf16, #tpu.memory_space<vmem>>, vector<2x256xbf16>,
    %28 = vector.extract_strided_slice %4 {offsets = [40, 0], sizes = [8, 256], strides = [1, 1]} : vector<64x256xbf16> to vector<8x256xbf16>
    %c61 = arith.constant 61 : index
    %c0_25 = arith.constant 0 : index
    %29 = vector.load %arg10[%c61, %c0_25] : memref<102x256xbf16, #tpu.memory_space<vmem>>, vector<8x256xbf16>
    tpu.vector_store %arg10[%c61, %c0_25], %28 {strides = array<i32>} : memref<102x256xbf16, #tpu.memory_space<vmem>>, vector<8x256xbf16>,
    %c69 = arith.constant 69 : index
    %c0_26 = arith.constant 0 : index
    %30 = vector.load %arg10[%c69, %c0_26] : memref<102x256xbf16, #tpu.memory_space<vmem>>, vector<2x256xbf16>
    tpu.vector_store %arg10[%c69, %c0_26], %12 {strides = array<i32>} : memref<102x256xbf16, #tpu.memory_space<vmem>>, vector<2x256xbf16>,
    %31 = vector.extract_strided_slice %4 {offsets = [48, 0], sizes = [8, 256], strides = [1, 1]} : vector<64x256xbf16> to vector<8x256xbf16>
    %c71 = arith.constant 71 : index
    %c0_27 = arith.constant 0 : index
    %32 = vector.load %arg10[%c71, %c0_27] : memref<102x256xbf16, #tpu.memory_space<vmem>>, vector<8x256xbf16>
    tpu.vector_store %arg10[%c71, %c0_27], %31 {strides = array<i32>} : memref<102x256xbf16, #tpu.memory_space<vmem>>, vector<8x256xbf16>,
    %c79 = arith.constant 79 : index
    %c0_28 = arith.constant 0 : index
    %33 = vector.load %arg10[%c79, %c0_28] : memref<102x256xbf16, #tpu.memory_space<vmem>>, vector<2x256xbf16>
    tpu.vector_store %arg10[%c79, %c0_28], %12 {strides = array<i32>} : memref<102x256xbf16, #tpu.memory_space<vmem>>, vector<2x256xbf16>,
    %34 = vector.extract_strided_slice %4 {offsets = [56, 0], sizes = [8, 256], strides = [1, 1]} : vector<64x256xbf16> to vector<8x256xbf16>
    %c81 = arith.constant 81 : index
    %c0_29 = arith.constant 0 : index
    %35 = vector.load %arg10[%c81, %c0_29] : memref<102x256xbf16, #tpu.memory_space<vmem>>, vector<8x256xbf16>
    tpu.vector_store %arg10[%c81, %c0_29], %34 {strides = array<i32>} : memref<102x256xbf16, #tpu.memory_space<vmem>>, vector<8x256xbf16>,
    %cst_30 = arith.constant 0.000000e+00 : bf16
    %36 = vector.broadcast %cst_30 : bf16 to vector<13x256xbf16>
    %c89 = arith.constant 89 : index
    %c0_31 = arith.constant 0 : index
    %37 = vector.load %arg10[%c89, %c0_31] : memref<102x256xbf16, #tpu.memory_space<vmem>>, vector<13x256xbf16>
    tpu.vector_store %arg10[%c89, %c0_31], %36 {strides = array<i32>} : memref<102x256xbf16, #tpu.memory_space<vmem>>, vector<13x256xbf16>,
    %cst_32 = arith.constant 0.000000e+00 : f32
    %38 = vector.broadcast %cst_32 : f32 to vector<80x128xf32>
    %c0_33 = arith.constant 0 : index
    %c0_34 = arith.constant 0 : index
    %39 = vector.load %arg10[%c0_33, %c0_34] : memref<102x256xbf16, #tpu.memory_space<vmem>>, vector<80x256xbf16>
    %c0_35 = arith.constant 0 : index
    %c0_36 = arith.constant 0 : index
    %c0_37 = arith.constant 0 : index
    %c0_38 = arith.constant 0 : index
    %40 = vector.load %arg3[%c0_35, %c0_36, %c0_37, %c0_38] : memref<3x3x256x128xbf16, #tpu.memory_space<vmem>>, vector<1x1x256x128xbf16>
    %41 = vector.shape_cast %40 : vector<1x1x256x128xbf16> to vector<256x128xbf16>
    %cst_39 = arith.constant dense<0.000000e+00> : vector<80x128xf32>
    %42 = tpu.matmul %39, %41, %cst_39 {dimension_numbers = #tpu.dot_dimension_numbers<[1], [0], [0], [1], [0, 0, 1, 1], [], []>} : vector<80x256xbf16>, vector<256x128xbf16>, vector<80x128xf32> -> vector<80x128xf32>
    %43 = arith.addf %38, %42 : vector<80x128xf32>
    %c1 = arith.constant 1 : index
    %c0_40 = arith.constant 0 : index
    %44 = vector.load %arg10[%c1, %c0_40] : memref<102x256xbf16, #tpu.memory_space<vmem>>, vector<80x256xbf16>
    %c0_41 = arith.constant 0 : index
    %c1_42 = arith.constant 1 : index
    %c0_43 = arith.constant 0 : index
    %c0_44 = arith.constant 0 : index
    %45 = vector.load %arg3[%c0_41, %c1_42, %c0_43, %c0_44] : memref<3x3x256x128xbf16, #tpu.memory_space<vmem>>, vector<1x1x256x128xbf16>
    %46 = vector.shape_cast %45 : vector<1x1x256x128xbf16> to vector<256x128xbf16>
    %cst_45 = arith.constant dense<0.000000e+00> : vector<80x128xf32>
    %47 = tpu.matmul %44, %46, %cst_45 {dimension_numbers = #tpu.dot_dimension_numbers<[1], [0], [0], [1], [0, 0, 1, 1], [], []>} : vector<80x256xbf16>, vector<256x128xbf16>, vector<80x128xf32> -> vector<80x128xf32>
    %48 = arith.addf %43, %47 : vector<80x128xf32>
    %c2 = arith.constant 2 : index
    %c0_46 = arith.constant 0 : index
    %49 = vector.load %arg10[%c2, %c0_46] : memref<102x256xbf16, #tpu.memory_space<vmem>>, vector<80x256xbf16>
    %c0_47 = arith.constant 0 : index
    %c2_48 = arith.constant 2 : index
    %c0_49 = arith.constant 0 : index
    %c0_50 = arith.constant 0 : index
    %50 = vector.load %arg3[%c0_47, %c2_48, %c0_49, %c0_50] : memref<3x3x256x128xbf16, #tpu.memory_space<vmem>>, vector<1x1x256x128xbf16>
    %51 = vector.shape_cast %50 : vector<1x1x256x128xbf16> to vector<256x128xbf16>
    %cst_51 = arith.constant dense<0.000000e+00> : vector<80x128xf32>
    %52 = tpu.matmul %49, %51, %cst_51 {dimension_numbers = #tpu.dot_dimension_numbers<[1], [0], [0], [1], [0, 0, 1, 1], [], []>} : vector<80x256xbf16>, vector<256x128xbf16>, vector<80x128xf32> -> vector<80x128xf32>
    %53 = arith.addf %48, %52 : vector<80x128xf32>
    %c10 = arith.constant 10 : index
    %c0_52 = arith.constant 0 : index
    %54 = vector.load %arg10[%c10, %c0_52] : memref<102x256xbf16, #tpu.memory_space<vmem>>, vector<80x256xbf16>
    %c1_53 = arith.constant 1 : index
    %c0_54 = arith.constant 0 : index
    %c0_55 = arith.constant 0 : index
    %c0_56 = arith.constant 0 : index
    %55 = vector.load %arg3[%c1_53, %c0_54, %c0_55, %c0_56] : memref<3x3x256x128xbf16, #tpu.memory_space<vmem>>, vector<1x1x256x128xbf16>
    %56 = vector.shape_cast %55 : vector<1x1x256x128xbf16> to vector<256x128xbf16>
    %cst_57 = arith.constant dense<0.000000e+00> : vector<80x128xf32>
    %57 = tpu.matmul %54, %56, %cst_57 {dimension_numbers = #tpu.dot_dimension_numbers<[1], [0], [0], [1], [0, 0, 1, 1], [], []>} : vector<80x256xbf16>, vector<256x128xbf16>, vector<80x128xf32> -> vector<80x128xf32>
    %58 = arith.addf %53, %57 : vector<80x128xf32>
    %c11_58 = arith.constant 11 : index
    %c0_59 = arith.constant 0 : index
    %59 = vector.load %arg10[%c11_58, %c0_59] : memref<102x256xbf16, #tpu.memory_space<vmem>>, vector<80x256xbf16>
    %c1_60 = arith.constant 1 : index
    %c1_61 = arith.constant 1 : index
    %c0_62 = arith.constant 0 : index
    %c0_63 = arith.constant 0 : index
    %60 = vector.load %arg3[%c1_60, %c1_61, %c0_62, %c0_63] : memref<3x3x256x128xbf16, #tpu.memory_space<vmem>>, vector<1x1x256x128xbf16>
    %61 = vector.shape_cast %60 : vector<1x1x256x128xbf16> to vector<256x128xbf16>
    %cst_64 = arith.constant dense<0.000000e+00> : vector<80x128xf32>
    %62 = tpu.matmul %59, %61, %cst_64 {dimension_numbers = #tpu.dot_dimension_numbers<[1], [0], [0], [1], [0, 0, 1, 1], [], []>} : vector<80x256xbf16>, vector<256x128xbf16>, vector<80x128xf32> -> vector<80x128xf32>
    %63 = arith.addf %58, %62 : vector<80x128xf32>
    %c12 = arith.constant 12 : index
    %c0_65 = arith.constant 0 : index
    %64 = vector.load %arg10[%c12, %c0_65] : memref<102x256xbf16, #tpu.memory_space<vmem>>, vector<80x256xbf16>
    %c1_66 = arith.constant 1 : index
    %c2_67 = arith.constant 2 : index
    %c0_68 = arith.constant 0 : index
    %c0_69 = arith.constant 0 : index
    %65 = vector.load %arg3[%c1_66, %c2_67, %c0_68, %c0_69] : memref<3x3x256x128xbf16, #tpu.memory_space<vmem>>, vector<1x1x256x128xbf16>
    %66 = vector.shape_cast %65 : vector<1x1x256x128xbf16> to vector<256x128xbf16>
    %cst_70 = arith.constant dense<0.000000e+00> : vector<80x128xf32>
    %67 = tpu.matmul %64, %66, %cst_70 {dimension_numbers = #tpu.dot_dimension_numbers<[1], [0], [0], [1], [0, 0, 1, 1], [], []>} : vector<80x256xbf16>, vector<256x128xbf16>, vector<80x128xf32> -> vector<80x128xf32>
    %68 = arith.addf %63, %67 : vector<80x128xf32>
    %c20 = arith.constant 20 : index
    %c0_71 = arith.constant 0 : index
    %69 = vector.load %arg10[%c20, %c0_71] : memref<102x256xbf16, #tpu.memory_space<vmem>>, vector<80x256xbf16>
    %c2_72 = arith.constant 2 : index
    %c0_73 = arith.constant 0 : index
    %c0_74 = arith.constant 0 : index
    %c0_75 = arith.constant 0 : index
    %70 = vector.load %arg3[%c2_72, %c0_73, %c0_74, %c0_75] : memref<3x3x256x128xbf16, #tpu.memory_space<vmem>>, vector<1x1x256x128xbf16>
    %71 = vector.shape_cast %70 : vector<1x1x256x128xbf16> to vector<256x128xbf16>
    %cst_76 = arith.constant dense<0.000000e+00> : vector<80x128xf32>
    %72 = tpu.matmul %69, %71, %cst_76 {dimension_numbers = #tpu.dot_dimension_numbers<[1], [0], [0], [1], [0, 0, 1, 1], [], []>} : vector<80x256xbf16>, vector<256x128xbf16>, vector<80x128xf32> -> vector<80x128xf32>
    %73 = arith.addf %68, %72 : vector<80x128xf32>
    %c21_77 = arith.constant 21 : index
    %c0_78 = arith.constant 0 : index
    %74 = vector.load %arg10[%c21_77, %c0_78] : memref<102x256xbf16, #tpu.memory_space<vmem>>, vector<80x256xbf16>
    %c2_79 = arith.constant 2 : index
    %c1_80 = arith.constant 1 : index
    %c0_81 = arith.constant 0 : index
    %c0_82 = arith.constant 0 : index
    %75 = vector.load %arg3[%c2_79, %c1_80, %c0_81, %c0_82] : memref<3x3x256x128xbf16, #tpu.memory_space<vmem>>, vector<1x1x256x128xbf16>
    %76 = vector.shape_cast %75 : vector<1x1x256x128xbf16> to vector<256x128xbf16>
    %cst_83 = arith.constant dense<0.000000e+00> : vector<80x128xf32>
    %77 = tpu.matmul %74, %76, %cst_83 {dimension_numbers = #tpu.dot_dimension_numbers<[1], [0], [0], [1], [0, 0, 1, 1], [], []>} : vector<80x256xbf16>, vector<256x128xbf16>, vector<80x128xf32> -> vector<80x128xf32>
    %78 = arith.addf %73, %77 : vector<80x128xf32>
    %c22 = arith.constant 22 : index
    %c0_84 = arith.constant 0 : index
    %79 = vector.load %arg10[%c22, %c0_84] : memref<102x256xbf16, #tpu.memory_space<vmem>>, vector<80x256xbf16>
    %c2_85 = arith.constant 2 : index
    %c2_86 = arith.constant 2 : index
    %c0_87 = arith.constant 0 : index
    %c0_88 = arith.constant 0 : index
    %80 = vector.load %arg3[%c2_85, %c2_86, %c0_87, %c0_88] : memref<3x3x256x128xbf16, #tpu.memory_space<vmem>>, vector<1x1x256x128xbf16>
    %81 = vector.shape_cast %80 : vector<1x1x256x128xbf16> to vector<256x128xbf16>
    %cst_89 = arith.constant dense<0.000000e+00> : vector<80x128xf32>
    %82 = tpu.matmul %79, %81, %cst_89 {dimension_numbers = #tpu.dot_dimension_numbers<[1], [0], [0], [1], [0, 0, 1, 1], [], []>} : vector<80x256xbf16>, vector<256x128xbf16>, vector<80x128xf32> -> vector<80x128xf32>
    %83 = arith.addf %78, %82 : vector<80x128xf32>
    %c0_90 = arith.constant 0 : index
    %c0_91 = arith.constant 0 : index
    %84 = vector.load %arg4[%c0_90, %c0_91] : memref<1x128xf32, #tpu.memory_space<vmem>>, vector<1x128xf32>
    %85 = vector.broadcast %84 : vector<1x128xf32> to vector<80x128xf32>
    %86 = arith.addf %83, %85 : vector<80x128xf32>
    %cst_92 = arith.constant 0.000000e+00 : f32
    %87 = vector.broadcast %cst_92 : f32 to vector<80x128xf32>
    %88 = arith.maximumf %86, %87 : vector<80x128xf32>
    %89 = arith.truncf %88 : vector<80x128xf32> to vector<80x128xbf16>
    %cst_93 = arith.constant 0.000000e+00 : bf16
    %90 = vector.broadcast %cst_93 : bf16 to vector<11x128xbf16>
    %c0_94 = arith.constant 0 : index
    %c0_95 = arith.constant 0 : index
    %91 = vector.load %arg11[%c0_94, %c0_95] : memref<102x128xbf16, #tpu.memory_space<vmem>>, vector<11x128xbf16>
    tpu.vector_store %arg11[%c0_94, %c0_95], %90 {strides = array<i32>} : memref<102x128xbf16, #tpu.memory_space<vmem>>, vector<11x128xbf16>,
    %cst_96 = arith.constant 0.000000e+00 : bf16
    %92 = vector.broadcast %cst_96 : bf16 to vector<2x128xbf16>
    %93 = vector.extract_strided_slice %89 {offsets = [0, 0], sizes = [8, 128], strides = [1, 1]} : vector<80x128xbf16> to vector<8x128xbf16>
    %c11_97 = arith.constant 11 : index
    %c0_98 = arith.constant 0 : index
    %94 = vector.load %arg11[%c11_97, %c0_98] : memref<102x128xbf16, #tpu.memory_space<vmem>>, vector<8x128xbf16>
    tpu.vector_store %arg11[%c11_97, %c0_98], %93 {strides = array<i32>} : memref<102x128xbf16, #tpu.memory_space<vmem>>, vector<8x128xbf16>,
    %c19_99 = arith.constant 19 : index
    %c0_100 = arith.constant 0 : index
    %95 = vector.load %arg11[%c19_99, %c0_100] : memref<102x128xbf16, #tpu.memory_space<vmem>>, vector<2x128xbf16>
    tpu.vector_store %arg11[%c19_99, %c0_100], %92 {strides = array<i32>} : memref<102x128xbf16, #tpu.memory_space<vmem>>, vector<2x128xbf16>,
    %96 = vector.extract_strided_slice %89 {offsets = [10, 0], sizes = [8, 128], strides = [1, 1]} : vector<80x128xbf16> to vector<8x128xbf16>
    %c21_101 = arith.constant 21 : index
    %c0_102 = arith.constant 0 : index
    %97 = vector.load %arg11[%c21_101, %c0_102] : memref<102x128xbf16, #tpu.memory_space<vmem>>, vector<8x128xbf16>
    tpu.vector_store %arg11[%c21_101, %c0_102], %96 {strides = array<i32>} : memref<102x128xbf16, #tpu.memory_space<vmem>>, vector<8x128xbf16>,
    %c29_103 = arith.constant 29 : index
    %c0_104 = arith.constant 0 : index
    %98 = vector.load %arg11[%c29_103, %c0_104] : memref<102x128xbf16, #tpu.memory_space<vmem>>, vector<2x128xbf16>
    tpu.vector_store %arg11[%c29_103, %c0_104], %92 {strides = array<i32>} : memref<102x128xbf16, #tpu.memory_space<vmem>>, vector<2x128xbf16>,
    %99 = vector.extract_strided_slice %89 {offsets = [20, 0], sizes = [8, 128], strides = [1, 1]} : vector<80x128xbf16> to vector<8x128xbf16>
    %c31_105 = arith.constant 31 : index
    %c0_106 = arith.constant 0 : index
    %100 = vector.load %arg11[%c31_105, %c0_106] : memref<102x128xbf16, #tpu.memory_space<vmem>>, vector<8x128xbf16>
    tpu.vector_store %arg11[%c31_105, %c0_106], %99 {strides = array<i32>} : memref<102x128xbf16, #tpu.memory_space<vmem>>, vector<8x128xbf16>,
    %c39_107 = arith.constant 39 : index
    %c0_108 = arith.constant 0 : index
    %101 = vector.load %arg11[%c39_107, %c0_108] : memref<102x128xbf16, #tpu.memory_space<vmem>>, vector<2x128xbf16>
    tpu.vector_store %arg11[%c39_107, %c0_108], %92 {strides = array<i32>} : memref<102x128xbf16, #tpu.memory_space<vmem>>, vector<2x128xbf16>,
    %102 = vector.extract_strided_slice %89 {offsets = [30, 0], sizes = [8, 128], strides = [1, 1]} : vector<80x128xbf16> to vector<8x128xbf16>
    %c41_109 = arith.constant 41 : index
    %c0_110 = arith.constant 0 : index
    %103 = vector.load %arg11[%c41_109, %c0_110] : memref<102x128xbf16, #tpu.memory_space<vmem>>, vector<8x128xbf16>
    tpu.vector_store %arg11[%c41_109, %c0_110], %102 {strides = array<i32>} : memref<102x128xbf16, #tpu.memory_space<vmem>>, vector<8x128xbf16>,
    %c49_111 = arith.constant 49 : index
    %c0_112 = arith.constant 0 : index
    %104 = vector.load %arg11[%c49_111, %c0_112] : memref<102x128xbf16, #tpu.memory_space<vmem>>, vector<2x128xbf16>
    tpu.vector_store %arg11[%c49_111, %c0_112], %92 {strides = array<i32>} : memref<102x128xbf16, #tpu.memory_space<vmem>>, vector<2x128xbf16>,
    %105 = vector.extract_strided_slice %89 {offsets = [40, 0], sizes = [8, 128], strides = [1, 1]} : vector<80x128xbf16> to vector<8x128xbf16>
    %c51_113 = arith.constant 51 : index
    %c0_114 = arith.constant 0 : index
    %106 = vector.load %arg11[%c51_113, %c0_114] : memref<102x128xbf16, #tpu.memory_space<vmem>>, vector<8x128xbf16>
    tpu.vector_store %arg11[%c51_113, %c0_114], %105 {strides = array<i32>} : memref<102x128xbf16, #tpu.memory_space<vmem>>, vector<8x128xbf16>,
    %c59_115 = arith.constant 59 : index
    %c0_116 = arith.constant 0 : index
    %107 = vector.load %arg11[%c59_115, %c0_116] : memref<102x128xbf16, #tpu.memory_space<vmem>>, vector<2x128xbf16>
    tpu.vector_store %arg11[%c59_115, %c0_116], %92 {strides = array<i32>} : memref<102x128xbf16, #tpu.memory_space<vmem>>, vector<2x128xbf16>,
    %108 = vector.extract_strided_slice %89 {offsets = [50, 0], sizes = [8, 128], strides = [1, 1]} : vector<80x128xbf16> to vector<8x128xbf16>
    %c61_117 = arith.constant 61 : index
    %c0_118 = arith.constant 0 : index
    %109 = vector.load %arg11[%c61_117, %c0_118] : memref<102x128xbf16, #tpu.memory_space<vmem>>, vector<8x128xbf16>
    tpu.vector_store %arg11[%c61_117, %c0_118], %108 {strides = array<i32>} : memref<102x128xbf16, #tpu.memory_space<vmem>>, vector<8x128xbf16>,
    %c69_119 = arith.constant 69 : index
    %c0_120 = arith.constant 0 : index
    %110 = vector.load %arg11[%c69_119, %c0_120] : memref<102x128xbf16, #tpu.memory_space<vmem>>, vector<2x128xbf16>
    tpu.vector_store %arg11[%c69_119, %c0_120], %92 {strides = array<i32>} : memref<102x128xbf16, #tpu.memory_space<vmem>>, vector<2x128xbf16>,
    %111 = vector.extract_strided_slice %89 {offsets = [60, 0], sizes = [8, 128], strides = [1, 1]} : vector<80x128xbf16> to vector<8x128xbf16>
    %c71_121 = arith.constant 71 : index
    %c0_122 = arith.constant 0 : index
    %112 = vector.load %arg11[%c71_121, %c0_122] : memref<102x128xbf16, #tpu.memory_space<vmem>>, vector<8x128xbf16>
    tpu.vector_store %arg11[%c71_121, %c0_122], %111 {strides = array<i32>} : memref<102x128xbf16, #tpu.memory_space<vmem>>, vector<8x128xbf16>,
    %c79_123 = arith.constant 79 : index
    %c0_124 = arith.constant 0 : index
    %113 = vector.load %arg11[%c79_123, %c0_124] : memref<102x128xbf16, #tpu.memory_space<vmem>>, vector<2x128xbf16>
    tpu.vector_store %arg11[%c79_123, %c0_124], %92 {strides = array<i32>} : memref<102x128xbf16, #tpu.memory_space<vmem>>, vector<2x128xbf16>,
    %114 = vector.extract_strided_slice %89 {offsets = [70, 0], sizes = [8, 128], strides = [1, 1]} : vector<80x128xbf16> to vector<8x128xbf16>
    %c81_125 = arith.constant 81 : index
    %c0_126 = arith.constant 0 : index
    %115 = vector.load %arg11[%c81_125, %c0_126] : memref<102x128xbf16, #tpu.memory_space<vmem>>, vector<8x128xbf16>
    tpu.vector_store %arg11[%c81_125, %c0_126], %114 {strides = array<i32>} : memref<102x128xbf16, #tpu.memory_space<vmem>>, vector<8x128xbf16>,
    %cst_127 = arith.constant 0.000000e+00 : bf16
    %116 = vector.broadcast %cst_127 : bf16 to vector<13x128xbf16>
    %c89_128 = arith.constant 89 : index
    %c0_129 = arith.constant 0 : index
    %117 = vector.load %arg11[%c89_128, %c0_129] : memref<102x128xbf16, #tpu.memory_space<vmem>>, vector<13x128xbf16>
    tpu.vector_store %arg11[%c89_128, %c0_129], %116 {strides = array<i32>} : memref<102x128xbf16, #tpu.memory_space<vmem>>, vector<13x128xbf16>,
    %cst_130 = arith.constant 0.000000e+00 : f32
    %118 = vector.broadcast %cst_130 : f32 to vector<80x128xf32>
    %c0_131 = arith.constant 0 : index
    %c0_132 = arith.constant 0 : index
    %119 = vector.load %arg11[%c0_131, %c0_132] : memref<102x128xbf16, #tpu.memory_space<vmem>>, vector<80x128xbf16>
    %c0_133 = arith.constant 0 : index
    %c0_134 = arith.constant 0 : index
    %c0_135 = arith.constant 0 : index
    %c0_136 = arith.constant 0 : index
    %120 = vector.load %arg5[%c0_133, %c0_134, %c0_135, %c0_136] : memref<3x3x128x128xbf16, #tpu.memory_space<vmem>>, vector<1x1x128x128xbf16>
    %121 = vector.shape_cast %120 : vector<1x1x128x128xbf16> to vector<128x128xbf16>
    %cst_137 = arith.constant dense<0.000000e+00> : vector<80x128xf32>
    %122 = tpu.matmul %119, %121, %cst_137 {dimension_numbers = #tpu.dot_dimension_numbers<[1], [0], [0], [1], [0, 0, 1, 1], [], []>} : vector<80x128xbf16>, vector<128x128xbf16>, vector<80x128xf32> -> vector<80x128xf32>
    %123 = arith.addf %118, %122 : vector<80x128xf32>
    %c1_138 = arith.constant 1 : index
    %c0_139 = arith.constant 0 : index
    %124 = vector.load %arg11[%c1_138, %c0_139] : memref<102x128xbf16, #tpu.memory_space<vmem>>, vector<80x128xbf16>
    %c0_140 = arith.constant 0 : index
    %c1_141 = arith.constant 1 : index
    %c0_142 = arith.constant 0 : index
    %c0_143 = arith.constant 0 : index
    %125 = vector.load %arg5[%c0_140, %c1_141, %c0_142, %c0_143] : memref<3x3x128x128xbf16, #tpu.memory_space<vmem>>, vector<1x1x128x128xbf16>
    %126 = vector.shape_cast %125 : vector<1x1x128x128xbf16> to vector<128x128xbf16>
    %cst_144 = arith.constant dense<0.000000e+00> : vector<80x128xf32>
    %127 = tpu.matmul %124, %126, %cst_144 {dimension_numbers = #tpu.dot_dimension_numbers<[1], [0], [0], [1], [0, 0, 1, 1], [], []>} : vector<80x128xbf16>, vector<128x128xbf16>, vector<80x128xf32> -> vector<80x128xf32>
    %128 = arith.addf %123, %127 : vector<80x128xf32>
    %c2_145 = arith.constant 2 : index
    %c0_146 = arith.constant 0 : index
    %129 = vector.load %arg11[%c2_145, %c0_146] : memref<102x128xbf16, #tpu.memory_space<vmem>>, vector<80x128xbf16>
    %c0_147 = arith.constant 0 : index
    %c2_148 = arith.constant 2 : index
    %c0_149 = arith.constant 0 : index
    %c0_150 = arith.constant 0 : index
    %130 = vector.load %arg5[%c0_147, %c2_148, %c0_149, %c0_150] : memref<3x3x128x128xbf16, #tpu.memory_space<vmem>>, vector<1x1x128x128xbf16>
    %131 = vector.shape_cast %130 : vector<1x1x128x128xbf16> to vector<128x128xbf16>
    %cst_151 = arith.constant dense<0.000000e+00> : vector<80x128xf32>
    %132 = tpu.matmul %129, %131, %cst_151 {dimension_numbers = #tpu.dot_dimension_numbers<[1], [0], [0], [1], [0, 0, 1, 1], [], []>} : vector<80x128xbf16>, vector<128x128xbf16>, vector<80x128xf32> -> vector<80x128xf32>
    %133 = arith.addf %128, %132 : vector<80x128xf32>
    %c10_152 = arith.constant 10 : index
    %c0_153 = arith.constant 0 : index
    %134 = vector.load %arg11[%c10_152, %c0_153] : memref<102x128xbf16, #tpu.memory_space<vmem>>, vector<80x128xbf16>
    %c1_154 = arith.constant 1 : index
    %c0_155 = arith.constant 0 : index
    %c0_156 = arith.constant 0 : index
    %c0_157 = arith.constant 0 : index
    %135 = vector.load %arg5[%c1_154, %c0_155, %c0_156, %c0_157] : memref<3x3x128x128xbf16, #tpu.memory_space<vmem>>, vector<1x1x128x128xbf16>
    %136 = vector.shape_cast %135 : vector<1x1x128x128xbf16> to vector<128x128xbf16>
    %cst_158 = arith.constant dense<0.000000e+00> : vector<80x128xf32>
    %137 = tpu.matmul %134, %136, %cst_158 {dimension_numbers = #tpu.dot_dimension_numbers<[1], [0], [0], [1], [0, 0, 1, 1], [], []>} : vector<80x128xbf16>, vector<128x128xbf16>, vector<80x128xf32> -> vector<80x128xf32>
    %138 = arith.addf %133, %137 : vector<80x128xf32>
    %c11_159 = arith.constant 11 : index
    %c0_160 = arith.constant 0 : index
    %139 = vector.load %arg11[%c11_159, %c0_160] : memref<102x128xbf16, #tpu.memory_space<vmem>>, vector<80x128xbf16>
    %c1_161 = arith.constant 1 : index
    %c1_162 = arith.constant 1 : index
    %c0_163 = arith.constant 0 : index
    %c0_164 = arith.constant 0 : index
    %140 = vector.load %arg5[%c1_161, %c1_162, %c0_163, %c0_164] : memref<3x3x128x128xbf16, #tpu.memory_space<vmem>>, vector<1x1x128x128xbf16>
    %141 = vector.shape_cast %140 : vector<1x1x128x128xbf16> to vector<128x128xbf16>
    %cst_165 = arith.constant dense<0.000000e+00> : vector<80x128xf32>
    %142 = tpu.matmul %139, %141, %cst_165 {dimension_numbers = #tpu.dot_dimension_numbers<[1], [0], [0], [1], [0, 0, 1, 1], [], []>} : vector<80x128xbf16>, vector<128x128xbf16>, vector<80x128xf32> -> vector<80x128xf32>
    %143 = arith.addf %138, %142 : vector<80x128xf32>
    %c12_166 = arith.constant 12 : index
    %c0_167 = arith.constant 0 : index
    %144 = vector.load %arg11[%c12_166, %c0_167] : memref<102x128xbf16, #tpu.memory_space<vmem>>, vector<80x128xbf16>
    %c1_168 = arith.constant 1 : index
    %c2_169 = arith.constant 2 : index
    %c0_170 = arith.constant 0 : index
    %c0_171 = arith.constant 0 : index
    %145 = vector.load %arg5[%c1_168, %c2_169, %c0_170, %c0_171] : memref<3x3x128x128xbf16, #tpu.memory_space<vmem>>, vector<1x1x128x128xbf16>
    %146 = vector.shape_cast %145 : vector<1x1x128x128xbf16> to vector<128x128xbf16>
    %cst_172 = arith.constant dense<0.000000e+00> : vector<80x128xf32>
    %147 = tpu.matmul %144, %146, %cst_172 {dimension_numbers = #tpu.dot_dimension_numbers<[1], [0], [0], [1], [0, 0, 1, 1], [], []>} : vector<80x128xbf16>, vector<128x128xbf16>, vector<80x128xf32> -> vector<80x128xf32>
    %148 = arith.addf %143, %147 : vector<80x128xf32>
    %c20_173 = arith.constant 20 : index
    %c0_174 = arith.constant 0 : index
    %149 = vector.load %arg11[%c20_173, %c0_174] : memref<102x128xbf16, #tpu.memory_space<vmem>>, vector<80x128xbf16>
    %c2_175 = arith.constant 2 : index
    %c0_176 = arith.constant 0 : index
    %c0_177 = arith.constant 0 : index
    %c0_178 = arith.constant 0 : index
    %150 = vector.load %arg5[%c2_175, %c0_176, %c0_177, %c0_178] : memref<3x3x128x128xbf16, #tpu.memory_space<vmem>>, vector<1x1x128x128xbf16>
    %151 = vector.shape_cast %150 : vector<1x1x128x128xbf16> to vector<128x128xbf16>
    %cst_179 = arith.constant dense<0.000000e+00> : vector<80x128xf32>
    %152 = tpu.matmul %149, %151, %cst_179 {dimension_numbers = #tpu.dot_dimension_numbers<[1], [0], [0], [1], [0, 0, 1, 1], [], []>} : vector<80x128xbf16>, vector<128x128xbf16>, vector<80x128xf32> -> vector<80x128xf32>
    %153 = arith.addf %148, %152 : vector<80x128xf32>
    %c21_180 = arith.constant 21 : index
    %c0_181 = arith.constant 0 : index
    %154 = vector.load %arg11[%c21_180, %c0_181] : memref<102x128xbf16, #tpu.memory_space<vmem>>, vector<80x128xbf16>
    %c2_182 = arith.constant 2 : index
    %c1_183 = arith.constant 1 : index
    %c0_184 = arith.constant 0 : index
    %c0_185 = arith.constant 0 : index
    %155 = vector.load %arg5[%c2_182, %c1_183, %c0_184, %c0_185] : memref<3x3x128x128xbf16, #tpu.memory_space<vmem>>, vector<1x1x128x128xbf16>
    %156 = vector.shape_cast %155 : vector<1x1x128x128xbf16> to vector<128x128xbf16>
    %cst_186 = arith.constant dense<0.000000e+00> : vector<80x128xf32>
    %157 = tpu.matmul %154, %156, %cst_186 {dimension_numbers = #tpu.dot_dimension_numbers<[1], [0], [0], [1], [0, 0, 1, 1], [], []>} : vector<80x128xbf16>, vector<128x128xbf16>, vector<80x128xf32> -> vector<80x128xf32>
    %158 = arith.addf %153, %157 : vector<80x128xf32>
    %c22_187 = arith.constant 22 : index
    %c0_188 = arith.constant 0 : index
    %159 = vector.load %arg11[%c22_187, %c0_188] : memref<102x128xbf16, #tpu.memory_space<vmem>>, vector<80x128xbf16>
    %c2_189 = arith.constant 2 : index
    %c2_190 = arith.constant 2 : index
    %c0_191 = arith.constant 0 : index
    %c0_192 = arith.constant 0 : index
    %160 = vector.load %arg5[%c2_189, %c2_190, %c0_191, %c0_192] : memref<3x3x128x128xbf16, #tpu.memory_space<vmem>>, vector<1x1x128x128xbf16>
    %161 = vector.shape_cast %160 : vector<1x1x128x128xbf16> to vector<128x128xbf16>
    %cst_193 = arith.constant dense<0.000000e+00> : vector<80x128xf32>
    %162 = tpu.matmul %159, %161, %cst_193 {dimension_numbers = #tpu.dot_dimension_numbers<[1], [0], [0], [1], [0, 0, 1, 1], [], []>} : vector<80x128xbf16>, vector<128x128xbf16>, vector<80x128xf32> -> vector<80x128xf32>
    %163 = arith.addf %158, %162 : vector<80x128xf32>
    %c0_194 = arith.constant 0 : index
    %c0_195 = arith.constant 0 : index
    %164 = vector.load %arg6[%c0_194, %c0_195] : memref<1x128xf32, #tpu.memory_space<vmem>>, vector<1x128xf32>
    %165 = vector.broadcast %164 : vector<1x128xf32> to vector<80x128xf32>
    %166 = arith.addf %163, %165 : vector<80x128xf32>
    %167 = vector.extract_strided_slice %166 {offsets = [0, 0], sizes = [8, 128], strides = [1, 1]} : vector<80x128xf32> to vector<8x128xf32>
    %168 = vector.extract_strided_slice %9 {offsets = [0, 0], sizes = [8, 128], strides = [1, 1]} : vector<64x128xf32> to vector<8x128xf32>
    %169 = arith.addf %167, %168 : vector<8x128xf32>
    %cst_196 = arith.constant 0.000000e+00 : f32
    %170 = vector.broadcast %cst_196 : f32 to vector<8x128xf32>
    %171 = arith.maximumf %169, %170 : vector<8x128xf32>
    %c0_i32 = arith.constant 0 : i32
    %c0_i32_197 = arith.constant 0 : i32
    %c0_i32_198 = arith.constant 0 : i32
    %172 = tpu.memref_slice %arg9[%c0_i32, %c0_i32_197, %c0_i32_198] : memref<1x64x128xf32, #tpu.memory_space<vmem>> -> memref<1x64x128xf32, #tpu.memory_space<vmem>>
    %173 = tpu.memref_squeeze %172 : memref<1x64x128xf32, #tpu.memory_space<vmem>> -> memref<64x128xf32, #tpu.memory_space<vmem>>
    %c0_199 = arith.constant 0 : index
    %c0_200 = arith.constant 0 : index
    %174 = vector.load %173[%c0_199, %c0_200] : memref<64x128xf32, #tpu.memory_space<vmem>>, vector<8x128xf32>
    tpu.vector_store %173[%c0_199, %c0_200], %171 {strides = array<i32>} : memref<64x128xf32, #tpu.memory_space<vmem>>, vector<8x128xf32>,
    %175 = vector.extract_strided_slice %166 {offsets = [10, 0], sizes = [8, 128], strides = [1, 1]} : vector<80x128xf32> to vector<8x128xf32>
    %176 = vector.extract_strided_slice %9 {offsets = [8, 0], sizes = [8, 128], strides = [1, 1]} : vector<64x128xf32> to vector<8x128xf32>
    %177 = arith.addf %175, %176 : vector<8x128xf32>
    %cst_201 = arith.constant 0.000000e+00 : f32
    %178 = vector.broadcast %cst_201 : f32 to vector<8x128xf32>
    %179 = arith.maximumf %177, %178 : vector<8x128xf32>
    %c0_i32_202 = arith.constant 0 : i32
    %c0_i32_203 = arith.constant 0 : i32
    %c0_i32_204 = arith.constant 0 : i32
    %180 = tpu.memref_slice %arg9[%c0_i32_202, %c0_i32_203, %c0_i32_204] : memref<1x64x128xf32, #tpu.memory_space<vmem>> -> memref<1x64x128xf32, #tpu.memory_space<vmem>>
    %181 = tpu.memref_squeeze %180 : memref<1x64x128xf32, #tpu.memory_space<vmem>> -> memref<64x128xf32, #tpu.memory_space<vmem>>
    %c8 = arith.constant 8 : index
    %c0_205 = arith.constant 0 : index
    %182 = vector.load %181[%c8, %c0_205] : memref<64x128xf32, #tpu.memory_space<vmem>>, vector<8x128xf32>
    tpu.vector_store %181[%c8, %c0_205], %179 {strides = array<i32>} : memref<64x128xf32, #tpu.memory_space<vmem>>, vector<8x128xf32>,
    %183 = vector.extract_strided_slice %166 {offsets = [20, 0], sizes = [8, 128], strides = [1, 1]} : vector<80x128xf32> to vector<8x128xf32>
    %184 = vector.extract_strided_slice %9 {offsets = [16, 0], sizes = [8, 128], strides = [1, 1]} : vector<64x128xf32> to vector<8x128xf32>
    %185 = arith.addf %183, %184 : vector<8x128xf32>
    %cst_206 = arith.constant 0.000000e+00 : f32
    %186 = vector.broadcast %cst_206 : f32 to vector<8x128xf32>
    %187 = arith.maximumf %185, %186 : vector<8x128xf32>
    %c0_i32_207 = arith.constant 0 : i32
    %c0_i32_208 = arith.constant 0 : i32
    %c0_i32_209 = arith.constant 0 : i32
    %188 = tpu.memref_slice %arg9[%c0_i32_207, %c0_i32_208, %c0_i32_209] : memref<1x64x128xf32, #tpu.memory_space<vmem>> -> memref<1x64x128xf32, #tpu.memory_space<vmem>>
    %189 = tpu.memref_squeeze %188 : memref<1x64x128xf32, #tpu.memory_space<vmem>> -> memref<64x128xf32, #tpu.memory_space<vmem>>
    %c16 = arith.constant 16 : index
    %c0_210 = arith.constant 0 : index
    %190 = vector.load %189[%c16, %c0_210] : memref<64x128xf32, #tpu.memory_space<vmem>>, vector<8x128xf32>
    tpu.vector_store %189[%c16, %c0_210], %187 {strides = array<i32>} : memref<64x128xf32, #tpu.memory_space<vmem>>, vector<8x128xf32>,
    %191 = vector.extract_strided_slice %166 {offsets = [30, 0], sizes = [8, 128], strides = [1, 1]} : vector<80x128xf32> to vector<8x128xf32>
    %192 = vector.extract_strided_slice %9 {offsets = [24, 0], sizes = [8, 128], strides = [1, 1]} : vector<64x128xf32> to vector<8x128xf32>
    %193 = arith.addf %191, %192 : vector<8x128xf32>
    %cst_211 = arith.constant 0.000000e+00 : f32
    %194 = vector.broadcast %cst_211 : f32 to vector<8x128xf32>
    %195 = arith.maximumf %193, %194 : vector<8x128xf32>
    %c0_i32_212 = arith.constant 0 : i32
    %c0_i32_213 = arith.constant 0 : i32
    %c0_i32_214 = arith.constant 0 : i32
    %196 = tpu.memref_slice %arg9[%c0_i32_212, %c0_i32_213, %c0_i32_214] : memref<1x64x128xf32, #tpu.memory_space<vmem>> -> memref<1x64x128xf32, #tpu.memory_space<vmem>>
    %197 = tpu.memref_squeeze %196 : memref<1x64x128xf32, #tpu.memory_space<vmem>> -> memref<64x128xf32, #tpu.memory_space<vmem>>
    %c24 = arith.constant 24 : index
    %c0_215 = arith.constant 0 : index
    %198 = vector.load %197[%c24, %c0_215] : memref<64x128xf32, #tpu.memory_space<vmem>>, vector<8x128xf32>
    tpu.vector_store %197[%c24, %c0_215], %195 {strides = array<i32>} : memref<64x128xf32, #tpu.memory_space<vmem>>, vector<8x128xf32>,
    %199 = vector.extract_strided_slice %166 {offsets = [40, 0], sizes = [8, 128], strides = [1, 1]} : vector<80x128xf32> to vector<8x128xf32>
    %200 = vector.extract_strided_slice %9 {offsets = [32, 0], sizes = [8, 128], strides = [1, 1]} : vector<64x128xf32> to vector<8x128xf32>
    %201 = arith.addf %199, %200 : vector<8x128xf32>
    %cst_216 = arith.constant 0.000000e+00 : f32
    %202 = vector.broadcast %cst_216 : f32 to vector<8x128xf32>
    %203 = arith.maximumf %201, %202 : vector<8x128xf32>
    %c0_i32_217 = arith.constant 0 : i32
    %c0_i32_218 = arith.constant 0 : i32
    %c0_i32_219 = arith.constant 0 : i32
    %204 = tpu.memref_slice %arg9[%c0_i32_217, %c0_i32_218, %c0_i32_219] : memref<1x64x128xf32, #tpu.memory_space<vmem>> -> memref<1x64x128xf32, #tpu.memory_space<vmem>>
    %205 = tpu.memref_squeeze %204 : memref<1x64x128xf32, #tpu.memory_space<vmem>> -> memref<64x128xf32, #tpu.memory_space<vmem>>
    %c32 = arith.constant 32 : index
    %c0_220 = arith.constant 0 : index
    %206 = vector.load %205[%c32, %c0_220] : memref<64x128xf32, #tpu.memory_space<vmem>>, vector<8x128xf32>
    tpu.vector_store %205[%c32, %c0_220], %203 {strides = array<i32>} : memref<64x128xf32, #tpu.memory_space<vmem>>, vector<8x128xf32>,
    %207 = vector.extract_strided_slice %166 {offsets = [50, 0], sizes = [8, 128], strides = [1, 1]} : vector<80x128xf32> to vector<8x128xf32>
    %208 = vector.extract_strided_slice %9 {offsets = [40, 0], sizes = [8, 128], strides = [1, 1]} : vector<64x128xf32> to vector<8x128xf32>
    %209 = arith.addf %207, %208 : vector<8x128xf32>
    %cst_221 = arith.constant 0.000000e+00 : f32
    %210 = vector.broadcast %cst_221 : f32 to vector<8x128xf32>
    %211 = arith.maximumf %209, %210 : vector<8x128xf32>
    %c0_i32_222 = arith.constant 0 : i32
    %c0_i32_223 = arith.constant 0 : i32
    %c0_i32_224 = arith.constant 0 : i32
    %212 = tpu.memref_slice %arg9[%c0_i32_222, %c0_i32_223, %c0_i32_224] : memref<1x64x128xf32, #tpu.memory_space<vmem>> -> memref<1x64x128xf32, #tpu.memory_space<vmem>>
    %213 = tpu.memref_squeeze %212 : memref<1x64x128xf32, #tpu.memory_space<vmem>> -> memref<64x128xf32, #tpu.memory_space<vmem>>
    %c40 = arith.constant 40 : index
    %c0_225 = arith.constant 0 : index
    %214 = vector.load %213[%c40, %c0_225] : memref<64x128xf32, #tpu.memory_space<vmem>>, vector<8x128xf32>
    tpu.vector_store %213[%c40, %c0_225], %211 {strides = array<i32>} : memref<64x128xf32, #tpu.memory_space<vmem>>, vector<8x128xf32>,
    %215 = vector.extract_strided_slice %166 {offsets = [60, 0], sizes = [8, 128], strides = [1, 1]} : vector<80x128xf32> to vector<8x128xf32>
    %216 = vector.extract_strided_slice %9 {offsets = [48, 0], sizes = [8, 128], strides = [1, 1]} : vector<64x128xf32> to vector<8x128xf32>
    %217 = arith.addf %215, %216 : vector<8x128xf32>
    %cst_226 = arith.constant 0.000000e+00 : f32
    %218 = vector.broadcast %cst_226 : f32 to vector<8x128xf32>
    %219 = arith.maximumf %217, %218 : vector<8x128xf32>
    %c0_i32_227 = arith.constant 0 : i32
    %c0_i32_228 = arith.constant 0 : i32
    %c0_i32_229 = arith.constant 0 : i32
    %220 = tpu.memref_slice %arg9[%c0_i32_227, %c0_i32_228, %c0_i32_229] : memref<1x64x128xf32, #tpu.memory_space<vmem>> -> memref<1x64x128xf32, #tpu.memory_space<vmem>>
    %221 = tpu.memref_squeeze %220 : memref<1x64x128xf32, #tpu.memory_space<vmem>> -> memref<64x128xf32, #tpu.memory_space<vmem>>
    %c48 = arith.constant 48 : index
    %c0_230 = arith.constant 0 : index
    %222 = vector.load %221[%c48, %c0_230] : memref<64x128xf32, #tpu.memory_space<vmem>>, vector<8x128xf32>
    tpu.vector_store %221[%c48, %c0_230], %219 {strides = array<i32>} : memref<64x128xf32, #tpu.memory_space<vmem>>, vector<8x128xf32>,
    %223 = vector.extract_strided_slice %166 {offsets = [70, 0], sizes = [8, 128], strides = [1, 1]} : vector<80x128xf32> to vector<8x128xf32>
    %224 = vector.extract_strided_slice %9 {offsets = [56, 0], sizes = [8, 128], strides = [1, 1]} : vector<64x128xf32> to vector<8x128xf32>
    %225 = arith.addf %223, %224 : vector<8x128xf32>
    %cst_231 = arith.constant 0.000000e+00 : f32
    %226 = vector.broadcast %cst_231 : f32 to vector<8x128xf32>
    %227 = arith.maximumf %225, %226 : vector<8x128xf32>
    %c0_i32_232 = arith.constant 0 : i32
    %c0_i32_233 = arith.constant 0 : i32
    %c0_i32_234 = arith.constant 0 : i32
    %228 = tpu.memref_slice %arg9[%c0_i32_232, %c0_i32_233, %c0_i32_234] : memref<1x64x128xf32, #tpu.memory_space<vmem>> -> memref<1x64x128xf32, #tpu.memory_space<vmem>>
    %229 = tpu.memref_squeeze %228 : memref<1x64x128xf32, #tpu.memory_space<vmem>> -> memref<64x128xf32, #tpu.memory_space<vmem>>
    %c56 = arith.constant 56 : index
    %c0_235 = arith.constant 0 : index
    %230 = vector.load %229[%c56, %c0_235] : memref<64x128xf32, #tpu.memory_space<vmem>>, vector<8x128xf32>
    tpu.vector_store %229[%c56, %c0_235], %227 {strides = array<i32>} : memref<64x128xf32, #tpu.memory_space<vmem>>, vector<8x128xf32>,
    return
  }
  func.func @transform_0(%arg0: i32) -> (i32, i32, i32, i32) {
    %c0_i32 = arith.constant 0 : i32
    %c0_i32_0 = arith.constant 0 : i32
    %c0_i32_1 = arith.constant 0 : i32
    %c0_i32_2 = arith.constant 0 : i32
    return %c0_i32, %arg0, %c0_i32_0, %c0_i32_1 : i32, i32, i32, i32
  }
  func.func @transform_1(%arg0: i32) -> (i32, i32, i32, i32) {
    %c1_i32 = arith.constant 1 : i32
    %c0_i32 = arith.constant 0 : i32
    %c0_i32_0 = arith.constant 0 : i32
    %c0_i32_1 = arith.constant 0 : i32
    return %c1_i32, %arg0, %c0_i32, %c0_i32_0 : i32, i32, i32, i32
  }
  func.func @transform_2(%arg0: i32) -> (i32, i32, i32, i32) {
    %c0_i32 = arith.constant 0 : i32
    %c0_i32_0 = arith.constant 0 : i32
    %c0_i32_1 = arith.constant 0 : i32
    %c0_i32_2 = arith.constant 0 : i32
    %c0_i32_3 = arith.constant 0 : i32
    return %c0_i32, %c0_i32_0, %c0_i32_1, %c0_i32_2 : i32, i32, i32, i32
  }
  func.func @transform_3(%arg0: i32) -> (i32, i32) {
    %c0_i32 = arith.constant 0 : i32
    %c0_i32_0 = arith.constant 0 : i32
    %c0_i32_1 = arith.constant 0 : i32
    return %c0_i32, %c0_i32_0 : i32, i32
  }
  func.func @transform_4(%arg0: i32) -> (i32, i32, i32, i32) {
    %c0_i32 = arith.constant 0 : i32
    %c0_i32_0 = arith.constant 0 : i32
    %c0_i32_1 = arith.constant 0 : i32
    %c0_i32_2 = arith.constant 0 : i32
    %c0_i32_3 = arith.constant 0 : i32
    return %c0_i32, %c0_i32_0, %c0_i32_1, %c0_i32_2 : i32, i32, i32, i32
  }
  func.func @transform_5(%arg0: i32) -> (i32, i32) {
    %c0_i32 = arith.constant 0 : i32
    %c0_i32_0 = arith.constant 0 : i32
    %c0_i32_1 = arith.constant 0 : i32
    return %c0_i32, %c0_i32_0 : i32, i32
  }
  func.func @transform_6(%arg0: i32) -> (i32, i32) {
    %c0_i32 = arith.constant 0 : i32
    %c0_i32_0 = arith.constant 0 : i32
    %c0_i32_1 = arith.constant 0 : i32
    return %c0_i32, %c0_i32_0 : i32, i32
  }
  func.func @transform_7(%arg0: i32) -> (i32, i32) {
    %c0_i32 = arith.constant 0 : i32
    %c0_i32_0 = arith.constant 0 : i32
    %c0_i32_1 = arith.constant 0 : i32
    return %c0_i32, %c0_i32_0 : i32, i32
  }
  func.func @transform_8(%arg0: i32) -> (i32, i32, i32) {
    %c0_i32 = arith.constant 0 : i32
    %c0_i32_0 = arith.constant 0 : i32
    %c0_i32_1 = arith.constant 0 : i32
    return %arg0, %c0_i32, %c0_i32_0 : i32, i32, i32
  }
}

</mosaic_0001>

<llo_original>
// kernel: neg.1
$region0: #{neg.1}
  #allocation0 [shape = 's32[1]{0}', space=sflag, size = 0x4, scoped, tag = 'scoped memory for neg.1']
  %s0 = inlined_call_operand.vmem [shape: f32[2,2,64], index: 0, kind: input, shape index: {}]
  %s1 = inlined_call_operand.vmem [shape: f32[2,2,64], index: 1, kind: output, shape index: {}]
  %v2 = vld [vmem:[%s0] sm:$0x3]
  %3 = xla_tuple %v2
  %4 = xla_tuple %3
  %v5 = vxor.u32 %v2, 2147483648
  %6 = xla_tuple %v5
  %7 = vst [vmem:[%s1] sm:$0x3] %v5
  %s8 = scalar_lea.vmem %s0, 2
  %v9 = vld [vmem:[%s8] sm:$0x3]
  %10 = xla_tuple %v9
  %11 = xla_tuple %10
  %v12 = vxor.u32 %v9, 2147483648
  %13 = xla_tuple %v12
  %s14 = scalar_lea.vmem %s1, 2
  %15 = vst [vmem:[%s14] sm:$0x3] %v12

</llo_original>
